<compile_context>
chip_gen: v7x
topology: tpu7x:2x2x1
jax: 0.10.0
libtpu: 0.0.40
codegen_flags: <defaults>
</compile_context>

<pallas_src>
import jax
import jax.numpy as jnp
from jax import lax
from jax.experimental import pallas as pl
from jax.experimental.pallas import tpu as pltpu

# TODO(synk): the real MobileViTv3-S backbone (model_structure.pt +
# checkpoint_ema_best.pt) has no in-script equivalent; a deterministic
# 1x1-conv + SiLU feature extractor stands in for it before the exact
# AdaptiveAvgPool2d(1) + squeeze head.


def _vmem_capacity_bytes() -> int:
    """Physical per-core VMEM (v5e/v6e: 128 MiB, v7x: 64 MiB); safe fallback."""
    try:
        return int(pltpu.get_tpu_info().vmem_capacity_bytes)
    except Exception:
        return 64 * 1024 * 1024


def _pick_batch_tile(n: int, cap: int = 8):
    """Return (tb, n_padded).

    With x in (C_in, N, HW) layout the batch tile is the sublane dim of the x
    block, so tb must be a multiple of 8 or the whole (padded) batch.  Rather
    than inflating tb to N for awkward N (VMEM pressure, one parallel grid
    step), N is padded up to a multiple of tb: bounded blocks and >=2
    'parallel' grid steps whenever N > cap (keeps both v7x TensorCores busy).
    """
    if n <= cap:
        return n, n                       # tiny batch: single tile, no padding
    tb = max(8, (cap // 8) * 8)
    for d in range(tb, 7, -8):            # exact multiple-of-8 divisor if any
        if n % d == 0:
            return d, n
    n_pad = -(-n // tb) * tb              # zero-pad; extra rows sliced off later
    return tb, n_pad


def _pick_spatial_chunk(hw: int, sc_max: int) -> int:
    """HW itself if it fits the budget, else the largest 128-multiple <= sc_max
    dividing HW, else sc_max (non-dividing) with a masked ragged tail."""
    if hw <= sc_max:
        return hw
    c = sc_max
    while c >= 128:
        if hw % c == 0:
            return c
        c -= 128
    return sc_max


def encoder_forward(img, w, b, *, batch_tile_cap: int = 8,
                    input_buffer_count: int = 2):
    """img: (N, C_in, H, W) f32 NCHW;  w: (C_out, C_in);  b: (C_out,).

    Returns (N, C_out) f32 == squeeze(AdaptiveAvgPool2d(1)(SiLU(conv1x1(img)))).
    input_buffer_count=3 adds a third x pipeline buffer (useful on v5e, where
    the strided x DMA is most likely to be latency-exposed; VMEM is plentiful).
    """
    N, C_in, H, W = img.shape
    C_out = w.shape[0]
    HW = H * W

    tb, N_pad = _pick_batch_tile(N, batch_tile_cap)
    nbt = N_pad // tb
    bufs = max(2, int(input_buffer_count))

    # ---- VMEM-budget-aware tile sizing -------------------------------------
    cap = _vmem_capacity_bytes()
    budget = cap // 2                       # working-set budget, leave headroom
    # The live mix/SiLU intermediate is bounded by the inner strip, not by sc.
    strip_cap = 1024
    while strip_cap > 128 and 4 * C_out * tb * strip_cap > budget // 3:
        strip_cap //= 2
    feat_bytes = 4 * C_out * tb * strip_cap
    fixed_bytes = 4 * (C_out * C_in + C_out + 2 * C_out * tb)   # w + b + acc + out
    avail_x = max(budget - feat_bytes - fixed_bytes, bufs * 4 * C_in * tb * 128)
    sc_max = max(128, (avail_x // (bufs * 4 * C_in * tb)) // 128 * 128)
    sc = _pick_spatial_chunk(HW, sc_max)
    n_k = pl.cdiv(HW, sc)
    needs_mask = (HW % sc) != 0
    strip = min(strip_cap, sc)
    inv_hw = 1.0 / float(HW)                # compile-time pool scale
    use_vpu = C_in <= 8                     # unrolled VPU mix only for tiny C_in

    # Raise the scoped-VMEM limit above the 16/32 MiB defaults to cover the
    # working set (never above ~3/4 of physical).
    ws = bufs * 4 * C_in * tb * sc + feat_bytes + fixed_bytes
    vmem_limit = int(min(cap * 3 // 4, max(32 * 2 ** 20, ws + 16 * 2 ** 20)))

    # (C_in, N, HW) layout: one cheap XLA transpose in the wrapper.
    x = jnp.transpose(img.reshape(N, C_in, HW), (1, 0, 2))
    if N_pad > N:
        x = jnp.pad(x, ((0, 0), (0, N_pad - N), (0, 0)))
    b2 = b.reshape(C_out, 1)

    def kernel(x_ref, w_ref, b_ref, o_ref, acc_ref):
        k = pl.program_id(1)

        @pl.when(k == 0)
        def _():
            acc_ref[...] = jnp.zeros_like(acc_ref)

        wv = w_ref[...]                      # (C_out, C_in)
        bcol = b_ref[...][:, :, None]        # (C_out, 1, 1)
        if use_vpu:
            # Hoisted once per grid step (JAX does not CSE broadcast_in_dim).
            wcols = [wv[:, c][:, None, None] for c in range(C_in)]

        def strip_partial(start, size):
            xs = x_ref[:, :, pl.ds(start, size)]          # (C_in, tb, size)
            if use_vpu:
                # xs[c] is a dense (tb, size) slab; broadcasting it along the
                # leading C_out dim needs no cross-sublane data movement.
                z = wcols[0] * xs[0][None, :, :]
                for c in range(1, C_in):
                    z = z + wcols[c] * xs[c][None, :, :]
            else:
                # MXU path: a single 2-D matmul with N = tb*size (batch folded
                # into the matmul N dimension).
                z = jnp.dot(wv, xs.reshape(C_in, tb * size),
                            preferred_element_type=jnp.float32)
                z = z.reshape(C_out, tb, size)
            z = z + bcol
            # SiLU; exp lands on the EUP slot.  Flip approx=True in
            # pl.reciprocal if the VALU slot ever binds (~1e-3 accuracy cost).
            z = z * pl.reciprocal(1.0 + jnp.exp(-z), approx=False)
            if needs_mask:
                lane = lax.broadcasted_iota(jnp.int32, (1, 1, size), 2)
                z = jnp.where(start + lane < HW - k * sc, z, 0.0)
            return jnp.sum(z, axis=-1)                    # (C_out, tb)

        full_strips = sc // strip
        rem = sc - full_strips * strip
        if full_strips == 1:
            acc_ref[...] += strip_partial(0, strip)
        else:
            @pl.loop(0, full_strips)
            def _(j):
                acc_ref[...] += strip_partial(pl.multiple_of(j * strip, 128),
                                              strip)
        if rem:
            acc_ref[...] += strip_partial(full_strips * strip, rem)

        @pl.when(k == pl.num_programs(1) - 1)
        def _():
            # AdaptiveAvgPool2d(1) + squeeze: written exactly once per batch tile.
            o_ref[0] = acc_ref[...] * inv_hw

    x_spec_kwargs = {}
    if bufs != 2:
        x_spec_kwargs["pipeline_mode"] = pl.Buffered(bufs)
    x_spec = pl.BlockSpec((C_in, tb, sc), lambda i, k: (0, i, k),
                          **x_spec_kwargs)

    out3 = pl.pallas_call(
        kernel,
        out_shape=jax.ShapeDtypeStruct((nbt, C_out, tb), jnp.float32),
        grid_spec=pltpu.PrefetchScalarGridSpec(
            num_scalar_prefetch=0,
            grid=(nbt, n_k),
            in_specs=[
                x_spec,
                pl.BlockSpec((C_out, C_in), lambda i, k: (0, 0)),
                pl.BlockSpec((C_out, 1), lambda i, k: (0, 0)),
            ],
            out_specs=pl.BlockSpec((1, C_out, tb), lambda i, k: (i, 0, 0)),
            scratch_shapes=[pltpu.VMEM((C_out, tb), jnp.float32)],
        ),
        compiler_params=pltpu.CompilerParams(
            dimension_semantics=("parallel", "arbitrary"),
            vmem_limit_bytes=vmem_limit),
    )(x, w, b2)

    out = jnp.transpose(out3, (0, 2, 1)).reshape(N_pad, C_out)
    return out[:N]


def _reference(img, w, b):
    """Plain-JAX reference for the same forward."""
    N, C_in, H, W = img.shape
    x = img.reshape(N, C_in, H * W)
    feat = jnp.einsum("oc,ncs->nos", w, x) + b[None, :, None]
    feat = feat * jax.nn.sigmoid(feat)
    return feat.mean(axis=-1)            # (N, C_out) == AdaptiveAvgPool2d(1)+squeeze


if __name__ == "__main__":
    # Small deterministic shapes: batch=2, in-channels=4, spatial=16x16,
    # backbone output feature channels=32.
    N, C_IN, H, W = 2, 4, 16, 16
    C_OUT = 32

    key = jax.random.PRNGKey(0)
    k_img, k_w, k_b = jax.random.split(key, 3)

    img = jax.random.normal(k_img, (N, C_IN, H, W), dtype=jnp.float32)
    w = jax.random.normal(k_w, (C_OUT, C_IN), dtype=jnp.float32) * 0.1
    b = jax.random.normal(k_b, (C_OUT,), dtype=jnp.float32) * 0.01

    out = jax.block_until_ready(encoder_forward(img, w, b))
    ref = _reference(img, w, b)

    assert out.shape == (N, C_OUT), out.shape
    assert jnp.allclose(out, ref, atol=2e-5, rtol=2e-5), \
        float(jnp.max(jnp.abs(out - ref)))

    print("KERNEL_OK")
</pallas_src>

<mosaic_0001>
module attributes {stable_mosaic.version = 11 : i64} {
  func.func @kernel(%arg0: i32, %arg1: i32, %arg2: memref<4x2x256xf32, #tpu.memory_space<vmem>>, %arg3: memref<32x4xf32, #tpu.memory_space<vmem>>, %arg4: memref<32x1xf32, #tpu.memory_space<vmem>>, %arg5: memref<1x32x2xf32, #tpu.memory_space<vmem>>, %arg6: memref<32x2xf32, #tpu.memory_space<vmem>>) attributes {dimension_semantics = [#tpu.dimension_semantics<parallel>, #tpu.dimension_semantics<arbitrary>], iteration_bounds = array<i64: 1, 1>, scalar_prefetch = 0 : i64, scratch_operands = 1 : i64, tpu.core_type = #tpu.core_type<tc>, window_params = [{transform_indices = @transform_0, window_bounds = array<i64: 4, 2, 256>}, {pipeline_mode = #tpu.pipeline_mode<synchronous>, transform_indices = @transform_1, window_bounds = array<i64: 32, 4>}, {pipeline_mode = #tpu.pipeline_mode<synchronous>, transform_indices = @transform_2, window_bounds = array<i64: 32, 1>}, {transform_indices = @transform_3, window_bounds = array<i64: 1, 32, 2>}]} {
    %c0_i32 = arith.constant 0 : i32
    %0 = arith.cmpi eq, %arg1, %c0_i32 : i32
    %1 = arith.extui %0 : i1 to i32
    %c0_i32_0 = arith.constant 0 : i32
    %2 = arith.cmpi ne, %1, %c0_i32_0 : i32
    scf.if %2 {
      %cst_15 = arith.constant 0.000000e+00 : f32
      %62 = vector.broadcast %cst_15 : f32 to vector<32x2xf32>
      %c0_16 = arith.constant 0 : index
      %c0_17 = arith.constant 0 : index
      %63 = vector.load %arg6[%c0_16, %c0_17] : memref<32x2xf32, #tpu.memory_space<vmem>>, vector<32x2xf32>
      tpu.vector_store %arg6[%c0_16, %c0_17], %62 {strides = array<i32>} : memref<32x2xf32, #tpu.memory_space<vmem>>, vector<32x2xf32>,
    } else {
    }
    %c0 = arith.constant 0 : index
    %c0_1 = arith.constant 0 : index
    %3 = vector.load %arg3[%c0, %c0_1] : memref<32x4xf32, #tpu.memory_space<vmem>>, vector<32x4xf32>
    %c0_2 = arith.constant 0 : index
    %c0_3 = arith.constant 0 : index
    %4 = vector.load %arg4[%c0_2, %c0_3] : memref<32x1xf32, #tpu.memory_space<vmem>>, vector<32x1xf32>
    %5 = vector.shape_cast %4 : vector<32x1xf32> to vector<32x1x1xf32>
    %6 = vector.extract_strided_slice %3 {offsets = [0, 0], sizes = [32, 1], strides = [1, 1]} : vector<32x4xf32> to vector<32x1xf32>
    %7 = vector.shape_cast %6 : vector<32x1xf32> to vector<32xf32>
    %8 = vector.shape_cast %7 : vector<32xf32> to vector<32x1x1xf32>
    %9 = vector.extract_strided_slice %3 {offsets = [0, 1], sizes = [32, 1], strides = [1, 1]} : vector<32x4xf32> to vector<32x1xf32>
    %10 = vector.shape_cast %9 : vector<32x1xf32> to vector<32xf32>
    %11 = vector.shape_cast %10 : vector<32xf32> to vector<32x1x1xf32>
    %12 = vector.extract_strided_slice %3 {offsets = [0, 2], sizes = [32, 1], strides = [1, 1]} : vector<32x4xf32> to vector<32x1xf32>
    %13 = vector.shape_cast %12 : vector<32x1xf32> to vector<32xf32>
    %14 = vector.shape_cast %13 : vector<32xf32> to vector<32x1x1xf32>
    %15 = vector.extract_strided_slice %3 {offsets = [0, 3], sizes = [32, 1], strides = [1, 1]} : vector<32x4xf32> to vector<32x1xf32>
    %16 = vector.shape_cast %15 : vector<32x1xf32> to vector<32xf32>
    %17 = vector.shape_cast %16 : vector<32xf32> to vector<32x1x1xf32>
    %c0_4 = arith.constant 0 : index
    %c0_5 = arith.constant 0 : index
    %18 = vector.load %arg6[%c0_4, %c0_5] : memref<32x2xf32, #tpu.memory_space<vmem>>, vector<32x2xf32>
    %c0_6 = arith.constant 0 : index
    %c0_7 = arith.constant 0 : index
    %c0_8 = arith.constant 0 : index
    %19 = vector.load %arg2[%c0_6, %c0_7, %c0_8] : memref<4x2x256xf32, #tpu.memory_space<vmem>>, vector<4x2x256xf32>
    %20 = vector.extract_strided_slice %19 {offsets = [0, 0, 0], sizes = [1, 2, 256], strides = [1, 1, 1]} : vector<4x2x256xf32> to vector<1x2x256xf32>
    %21 = vector.shape_cast %20 : vector<1x2x256xf32> to vector<2x256xf32>
    %22 = vector.shape_cast %21 : vector<2x256xf32> to vector<1x2x256xf32>
    %23 = vector.broadcast %8 : vector<32x1x1xf32> to vector<32x2x256xf32>
    %24 = vector.broadcast %22 : vector<1x2x256xf32> to vector<32x2x256xf32>
    %25 = arith.mulf %23, %24 : vector<32x2x256xf32>
    %26 = vector.extract_strided_slice %19 {offsets = [1, 0, 0], sizes = [1, 2, 256], strides = [1, 1, 1]} : vector<4x2x256xf32> to vector<1x2x256xf32>
    %27 = vector.shape_cast %26 : vector<1x2x256xf32> to vector<2x256xf32>
    %28 = vector.shape_cast %27 : vector<2x256xf32> to vector<1x2x256xf32>
    %29 = vector.broadcast %11 : vector<32x1x1xf32> to vector<32x2x256xf32>
    %30 = vector.broadcast %28 : vector<1x2x256xf32> to vector<32x2x256xf32>
    %31 = arith.mulf %29, %30 : vector<32x2x256xf32>
    %32 = arith.addf %25, %31 : vector<32x2x256xf32>
    %33 = vector.extract_strided_slice %19 {offsets = [2, 0, 0], sizes = [1, 2, 256], strides = [1, 1, 1]} : vector<4x2x256xf32> to vector<1x2x256xf32>
    %34 = vector.shape_cast %33 : vector<1x2x256xf32> to vector<2x256xf32>
    %35 = vector.shape_cast %34 : vector<2x256xf32> to vector<1x2x256xf32>
    %36 = vector.broadcast %14 : vector<32x1x1xf32> to vector<32x2x256xf32>
    %37 = vector.broadcast %35 : vector<1x2x256xf32> to vector<32x2x256xf32>
    %38 = arith.mulf %36, %37 : vector<32x2x256xf32>
    %39 = arith.addf %32, %38 : vector<32x2x256xf32>
    %40 = vector.extract_strided_slice %19 {offsets = [3, 0, 0], sizes = [1, 2, 256], strides = [1, 1, 1]} : vector<4x2x256xf32> to vector<1x2x256xf32>
    %41 = vector.shape_cast %40 : vector<1x2x256xf32> to vector<2x256xf32>
    %42 = vector.shape_cast %41 : vector<2x256xf32> to vector<1x2x256xf32>
    %43 = vector.broadcast %17 : vector<32x1x1xf32> to vector<32x2x256xf32>
    %44 = vector.broadcast %42 : vector<1x2x256xf32> to vector<32x2x256xf32>
    %45 = arith.mulf %43, %44 : vector<32x2x256xf32>
    %46 = arith.addf %39, %45 : vector<32x2x256xf32>
    %47 = vector.broadcast %5 : vector<32x1x1xf32> to vector<32x2x256xf32>
    %48 = arith.addf %46, %47 : vector<32x2x256xf32>
    %cst = arith.constant 0.000000e+00 : f32
    %49 = vector.broadcast %cst : f32 to vector<32x2x256xf32>
    %50 = arith.subf %49, %48 : vector<32x2x256xf32>
    %51 = math.exp %50 : vector<32x2x256xf32>
    %cst_9 = arith.constant 1.000000e+00 : f32
    %52 = vector.broadcast %cst_9 : f32 to vector<32x2x256xf32>
    %53 = arith.addf %52, %51 : vector<32x2x256xf32>
    %54 = tpu.reciprocal %53 : vector<32x2x256xf32> -> vector<32x2x256xf32>
    %55 = arith.mulf %48, %54 : vector<32x2x256xf32>
    %cst_10 = arith.constant dense<0.000000e+00> : vector<32x2xf32>
    %56 = vector.multi_reduction <add>, %55, %cst_10 [2] : vector<32x2x256xf32> to vector<32x2xf32>
    %57 = arith.addf %18, %56 : vector<32x2xf32>
    %c0_11 = arith.constant 0 : index
    %c0_12 = arith.constant 0 : index
    %58 = vector.load %arg6[%c0_11, %c0_12] : memref<32x2xf32, #tpu.memory_space<vmem>>, vector<32x2xf32>
    tpu.vector_store %arg6[%c0_11, %c0_12], %57 {strides = array<i32>} : memref<32x2xf32, #tpu.memory_space<vmem>>, vector<32x2xf32>,
    %c0_i32_13 = arith.constant 0 : i32
    %59 = arith.cmpi eq, %arg1, %c0_i32_13 : i32
    %60 = arith.extui %59 : i1 to i32
    %c0_i32_14 = arith.constant 0 : i32
    %61 = arith.cmpi ne, %60, %c0_i32_14 : i32
    scf.if %61 {
      %c0_15 = arith.constant 0 : index
      %c0_16 = arith.constant 0 : index
      %62 = vector.load %arg6[%c0_15, %c0_16] : memref<32x2xf32, #tpu.memory_space<vmem>>, vector<32x2xf32>
      %cst_17 = arith.constant 3.906250e-03 : f32
      %63 = vector.broadcast %cst_17 : f32 to vector<32x2xf32>
      %64 = arith.mulf %62, %63 : vector<32x2xf32>
      %c0_18 = arith.constant 0 : index
      %c0_19 = arith.constant 0 : index
      %c0_20 = arith.constant 0 : index
      %65 = vector.load %arg5[%c0_18, %c0_19, %c0_20] : memref<1x32x2xf32, #tpu.memory_space<vmem>>, vector<1x32x2xf32>
      %66 = vector.shape_cast %65 : vector<1x32x2xf32> to vector<32x2xf32>
      %67 = vector.shape_cast %64 : vector<32x2xf32> to vector<1x32x2xf32>
      tpu.vector_store %arg5[%c0_18, %c0_19, %c0_20], %67 {strides = array<i32>} : memref<1x32x2xf32, #tpu.memory_space<vmem>>, vector<1x32x2xf32>,
    } else {
    }
    return
  }
  func.func @transform_0(%arg0: i32, %arg1: i32) -> (i32, i32, i32) {
    %c0_i32 = arith.constant 0 : i32
    %c0_i32_0 = arith.constant 0 : i32
    return %c0_i32, %arg0, %arg1 : i32, i32, i32
  }
  func.func @transform_1(%arg0: i32, %arg1: i32) -> (i32, i32) {
    %c0_i32 = arith.constant 0 : i32
    %c0_i32_0 = arith.constant 0 : i32
    %c0_i32_1 = arith.constant 0 : i32
    return %c0_i32, %c0_i32_0 : i32, i32
  }
  func.func @transform_2(%arg0: i32, %arg1: i32) -> (i32, i32) {
    %c0_i32 = arith.constant 0 : i32
    %c0_i32_0 = arith.constant 0 : i32
    %c0_i32_1 = arith.constant 0 : i32
    return %c0_i32, %c0_i32_0 : i32, i32
  }
  func.func @transform_3(%arg0: i32, %arg1: i32) -> (i32, i32, i32) {
    %c0_i32 = arith.constant 0 : i32
    %c0_i32_0 = arith.constant 0 : i32
    %c0_i32_1 = arith.constant 0 : i32
    return %arg0, %c0_i32, %c0_i32_0 : i32, i32, i32
  }
}

</mosaic_0001>

<llo_original>
// kernel: tpu_custom_call.1
$region0: #{tpu_custom_call.1}
  #allocation0 [shape = 'u32[]', space=smem, size = 0x4, offset = 0x4, fixed_abs, tag = 'smem constant byte address 0x4 - core index']
  #allocation1 [shape = 'u32[144,128]{1,0:T(1,128)}', space=vmem, size = 0x12000, scoped, tag = 'internal scratch']
  #allocation2 [shape = 'f32[32,2]{1,0:T(8,128)}', space=vmem, size = 0x4000, scoped, tag = 'scratch operand']
  %s0 = inlined_call_operand.vmem [shape: f32[4,2,256], index: 0, kind: input, shape index: {}]
  %s1 = inlined_call_operand.vmem [shape: f32[32,4], index: 1, kind: input, shape index: {}]
  %s2 = inlined_call_operand.vmem [shape: f32[32,1], index: 2, kind: input, shape index: {}]
  %s3 = inlined_call_operand.vmem [shape: f32[1,32,2], index: 3, kind: output, shape index: {}]
  %s4 = sld [smem:[#allocation0]]
  $region30: #{tpu_custom_call.1} parent=0
    _
  %s6 = ssub.s32 1, %s4
  %s7 = scalar_select 0, %s6, %s4
  // Predicated region
  $region2: #{tpu_custom_call.1} parent=0 // pred_check
    _
  $region3: #{tpu_custom_call.1} parent=0 // pred_check_branch
    %9 = sbr.rel (0) target = $region5
  $region4: #{tpu_custom_call.1} parent=0 // pred_region
    _
  $region5: #{tpu_custom_call.1} parent=0 // pred_fallthru
    _
  // Predicated region
  $region6: #{tpu_custom_call.1} parent=0 // pred_check
    _
  $region7: #{tpu_custom_call.1} parent=0 // pred_check_branch
    %11 = sbr.rel (0) target = $region9
  $region8: #{tpu_custom_call.1} parent=0 // pred_region
    _
  $region9: #{tpu_custom_call.1} parent=0 // pred_fallthru
    _
  // Predicated region
  $region10: #{tpu_custom_call.1} parent=0 // pred_check
    _
  $region11: #{tpu_custom_call.1} parent=0 // pred_check_branch
    %13 = sbr.rel (0) target = $region13
  $region12: #{tpu_custom_call.1} parent=0 // pred_region
    _
  $region13: #{tpu_custom_call.1} parent=0 // pred_fallthru
    _
  %p14 = scmp.eq.s32.totalorder 0, 0
  // Predicated region
  $region14: #{tpu_custom_call.1} parent=0 // pred_check
    %p15 = pneg %p14
  $region15: #{tpu_custom_call.1} parent=0 // pred_check_branch
    %17 = sbr.rel (%p15) target = $region17
  $region16: #{tpu_custom_call.1} parent=0 // pred_region
    %vm18 = vcmask 15360
    %19 = vst.msk [vmem:[#allocation2] sm:$0xff] %vm18, 0.0
    %20 = vst.msk [vmem:[#allocation2 + $0x8] sm:$0xff] %vm18, 0.0
    %21 = vst.msk [vmem:[#allocation2 + $0x10] sm:$0xff] %vm18, 0.0
    %22 = vst.msk [vmem:[#allocation2 + $0x18] sm:$0xff] %vm18, 0.0
  $region17: #{tpu_custom_call.1} parent=0 // pred_fallthru
    _
  %v23 = vld [vmem:[%s1] sm:$0xff]
  %v24 = vld [vmem:[%s1 + $0x8] sm:$0xff]
  %v25 = vld [vmem:[%s1 + $0x10] sm:$0xff]
  %v26 = vld [vmem:[%s1 + $0x18] sm:$0xff]
  %v27 = vld [vmem:[%s2] sm:$0xff]
  %v28 = vld [vmem:[%s2 + $0x8] sm:$0xff]
  %v29 = vld [vmem:[%s2 + $0x10] sm:$0xff]
  %v30 = vld [vmem:[%s2 + $0x18] sm:$0xff]
  %v35 = vcombine.high %v27, %v27
  %v37 = vunpack.c.l.s4 1966171168
  %v38 = vunpack.c.0.s8 %v37
  %v39 = vlaneseq
  %v40 = vshrl.u32 %v39, 7
  %v41 = vsub.s32 %v38, %v40
  %v42 = vrot.slane %v27, %v41
  %v44 = vunpack.c.l.s4 1966171168
  %v45 = vunpack.c.0.s8 %v44
  %v46 = vlaneseq
  %v47 = vshrl.u32 %v46, 7
  %v48 = vsub.s32 %v45, %v47
  %v49 = vrot.slane %v35, %v48
  %v50 = vcombine.high %v42, %v42
  %v51 = vcombine.high %v49, %v49
  %v53 = vunpack.c.l.s4 1966171168
  %v54 = vunpack.c.0.s8 %v53
  %v55 = vlaneseq
  %v56 = vshrl.u32 %v55, 7
  %v57 = vsub.s32 %v54, %v56
  %v58 = vrot.slane %v42, %v57
  %v60 = vunpack.c.l.s4 1966171168
  %v61 = vunpack.c.0.s8 %v60
  %v62 = vlaneseq
  %v63 = vshrl.u32 %v62, 7
  %v64 = vsub.s32 %v61, %v63
  %v65 = vrot.slane %v49, %v64
  %v67 = vunpack.c.l.s4 1966171168
  %v68 = vunpack.c.0.s8 %v67
  %v69 = vlaneseq
  %v70 = vshrl.u32 %v69, 7
  %v71 = vsub.s32 %v68, %v70
  %v72 = vrot.slane %v50, %v71
  %v74 = vunpack.c.l.s4 1966171168
  %v75 = vunpack.c.0.s8 %v74
  %v76 = vlaneseq
  %v77 = vshrl.u32 %v76, 7
  %v78 = vsub.s32 %v75, %v77
  %v79 = vrot.slane %v51, %v78
  %v80 = vcombine.high %v58, %v58
  %v81 = vcombine.high %v65, %v65
  %v82 = vcombine.high %v72, %v72
  %v83 = vcombine.high %v79, %v79
  %v84 = vcombine.high %v28, %v28
  %v86 = vunpack.c.l.s4 1966171168
  %v87 = vunpack.c.0.s8 %v86
  %v88 = vlaneseq
  %v89 = vshrl.u32 %v88, 7
  %v90 = vsub.s32 %v87, %v89
  %v91 = vrot.slane %v28, %v90
  %v93 = vunpack.c.l.s4 1966171168
  %v94 = vunpack.c.0.s8 %v93
  %v95 = vlaneseq
  %v96 = vshrl.u32 %v95, 7
  %v97 = vsub.s32 %v94, %v96
  %v98 = vrot.slane %v84, %v97
  %v99 = vcombine.high %v91, %v91
  %v100 = vcombine.high %v98, %v98
  %v102 = vunpack.c.l.s4 1966171168
  %v103 = vunpack.c.0.s8 %v102
  %v104 = vlaneseq
  %v105 = vshrl.u32 %v104, 7
  %v106 = vsub.s32 %v103, %v105
  %v107 = vrot.slane %v91, %v106
  %v109 = vunpack.c.l.s4 1966171168
  %v110 = vunpack.c.0.s8 %v109
  %v111 = vlaneseq
  %v112 = vshrl.u32 %v111, 7
  %v113 = vsub.s32 %v110, %v112
  %v114 = vrot.slane %v98, %v113
  %v116 = vunpack.c.l.s4 1966171168
  %v117 = vunpack.c.0.s8 %v116
  %v118 = vlaneseq
  %v119 = vshrl.u32 %v118, 7
  %v120 = vsub.s32 %v117, %v119
  %v121 = vrot.slane %v99, %v120
  %v123 = vunpack.c.l.s4 1966171168
  %v124 = vunpack.c.0.s8 %v123
  %v125 = vlaneseq
  %v126 = vshrl.u32 %v125, 7
  %v127 = vsub.s32 %v124, %v126
  %v128 = vrot.slane %v100, %v127
  %v129 = vcombine.high %v107, %v107
  %v130 = vcombine.high %v114, %v114
  %v131 = vcombine.high %v121, %v121
  %v132 = vcombine.high %v128, %v128
  %v133 = vcombine.high %v29, %v29
  %v135 = vunpack.c.l.s4 1966171168
  %v136 = vunpack.c.0.s8 %v135
  %v137 = vlaneseq
  %v138 = vshrl.u32 %v137, 7
  %v139 = vsub.s32 %v136, %v138
  %v140 = vrot.slane %v29, %v139
  %v142 = vunpack.c.l.s4 1966171168
  %v143 = vunpack.c.0.s8 %v142
  %v144 = vlaneseq
  %v145 = vshrl.u32 %v144, 7
  %v146 = vsub.s32 %v143, %v145
  %v147 = vrot.slane %v133, %v146
  %v148 = vcombine.high %v140, %v140
  %v149 = vcombine.high %v147, %v147
  %v151 = vunpack.c.l.s4 1966171168
  %v152 = vunpack.c.0.s8 %v151
  %v153 = vlaneseq
  %v154 = vshrl.u32 %v153, 7
  %v155 = vsub.s32 %v152, %v154
  %v156 = vrot.slane %v140, %v155
  %v158 = vunpack.c.l.s4 1966171168
  %v159 = vunpack.c.0.s8 %v158
  %v160 = vlaneseq
  %v161 = vshrl.u32 %v160, 7
  %v162 = vsub.s32 %v159, %v161
  %v163 = vrot.slane %v147, %v162
  %v165 = vunpack.c.l.s4 1966171168
  %v166 = vunpack.c.0.s8 %v165
  %v167 = vlaneseq
  %v168 = vshrl.u32 %v167, 7
  %v169 = vsub.s32 %v166, %v168
  %v170 = vrot.slane %v148, %v169
  %v172 = vunpack.c.l.s4 1966171168
  %v173 = vunpack.c.0.s8 %v172
  %v174 = vlaneseq
  %v175 = vshrl.u32 %v174, 7
  %v176 = vsub.s32 %v173, %v175
  %v177 = vrot.slane %v149, %v176
  %v178 = vcombine.high %v156, %v156
  %v179 = vcombine.high %v163, %v163
  %v180 = vcombine.high %v170, %v170
  %v181 = vcombine.high %v177, %v177
  %v182 = vcombine.high %v30, %v30
  %v184 = vunpack.c.l.s4 1966171168
  %v185 = vunpack.c.0.s8 %v184
  %v186 = vlaneseq
  %v187 = vshrl.u32 %v186, 7
  %v188 = vsub.s32 %v185, %v187
  %v189 = vrot.slane %v30, %v188
  %v191 = vunpack.c.l.s4 1966171168
  %v192 = vunpack.c.0.s8 %v191
  %v193 = vlaneseq
  %v194 = vshrl.u32 %v193, 7
  %v195 = vsub.s32 %v192, %v194
  %v196 = vrot.slane %v182, %v195
  %v197 = vcombine.high %v189, %v189
  %v198 = vcombine.high %v196, %v196
  %v200 = vunpack.c.l.s4 1966171168
  %v201 = vunpack.c.0.s8 %v200
  %v202 = vlaneseq
  %v203 = vshrl.u32 %v202, 7
  %v204 = vsub.s32 %v201, %v203
  %v205 = vrot.slane %v189, %v204
  %v207 = vunpack.c.l.s4 1966171168
  %v208 = vunpack.c.0.s8 %v207
  %v209 = vlaneseq
  %v210 = vshrl.u32 %v209, 7
  %v211 = vsub.s32 %v208, %v210
  %v212 = vrot.slane %v196, %v211
  %v214 = vunpack.c.l.s4 1966171168
  %v215 = vunpack.c.0.s8 %v214
  %v216 = vlaneseq
  %v217 = vshrl.u32 %v216, 7
  %v218 = vsub.s32 %v215, %v217
  %v219 = vrot.slane %v197, %v218
  %v221 = vunpack.c.l.s4 1966171168
  %v222 = vunpack.c.0.s8 %v221
  %v223 = vlaneseq
  %v224 = vshrl.u32 %v223, 7
  %v225 = vsub.s32 %v222, %v224
  %v226 = vrot.slane %v198, %v225
  %v227 = vcombine.high %v205, %v205
  %v228 = vcombine.high %v212, %v212
  %v229 = vcombine.high %v219, %v219
  %v230 = vcombine.high %v226, %v226
  %v235 = vcombine.high %v23, %v23
  %v237 = vunpack.c.l.s4 1966171168
  %v238 = vunpack.c.0.s8 %v237
  %v239 = vlaneseq
  %v240 = vshrl.u32 %v239, 7
  %v241 = vsub.s32 %v238, %v240
  %v242 = vrot.slane %v23, %v241
  %v244 = vunpack.c.l.s4 1966171168
  %v245 = vunpack.c.0.s8 %v244
  %v246 = vlaneseq
  %v247 = vshrl.u32 %v246, 7
  %v248 = vsub.s32 %v245, %v247
  %v249 = vrot.slane %v235, %v248
  %v250 = vcombine.high %v242, %v242
  %v251 = vcombine.high %v249, %v249
  %v253 = vunpack.c.l.s4 1966171168
  %v254 = vunpack.c.0.s8 %v253
  %v255 = vlaneseq
  %v256 = vshrl.u32 %v255, 7
  %v257 = vsub.s32 %v254, %v256
  %v258 = vrot.slane %v242, %v257
  %v260 = vunpack.c.l.s4 1966171168
  %v261 = vunpack.c.0.s8 %v260
  %v262 = vlaneseq
  %v263 = vshrl.u32 %v262, 7
  %v264 = vsub.s32 %v261, %v263
  %v265 = vrot.slane %v249, %v264
  %v267 = vunpack.c.l.s4 1966171168
  %v268 = vunpack.c.0.s8 %v267
  %v269 = vlaneseq
  %v270 = vshrl.u32 %v269, 7
  %v271 = vsub.s32 %v268, %v270
  %v272 = vrot.slane %v250, %v271
  %v274 = vunpack.c.l.s4 1966171168
  %v275 = vunpack.c.0.s8 %v274
  %v276 = vlaneseq
  %v277 = vshrl.u32 %v276, 7
  %v278 = vsub.s32 %v275, %v277
  %v279 = vrot.slane %v251, %v278
  %v280 = vcombine.high %v258, %v258
  %v281 = vcombine.high %v265, %v265
  %v282 = vcombine.high %v272, %v272
  %v283 = vcombine.high %v279, %v279
  %v284 = vcombine.high %v24, %v24
  %v286 = vunpack.c.l.s4 1966171168
  %v287 = vunpack.c.0.s8 %v286
  %v288 = vlaneseq
  %v289 = vshrl.u32 %v288, 7
  %v290 = vsub.s32 %v287, %v289
  %v291 = vrot.slane %v24, %v290
  %v293 = vunpack.c.l.s4 1966171168
  %v294 = vunpack.c.0.s8 %v293
  %v295 = vlaneseq
  %v296 = vshrl.u32 %v295, 7
  %v297 = vsub.s32 %v294, %v296
  %v298 = vrot.slane %v284, %v297
  %v299 = vcombine.high %v291, %v291
  %v300 = vcombine.high %v298, %v298
  %v302 = vunpack.c.l.s4 1966171168
  %v303 = vunpack.c.0.s8 %v302
  %v304 = vlaneseq
  %v305 = vshrl.u32 %v304, 7
  %v306 = vsub.s32 %v303, %v305
  %v307 = vrot.slane %v291, %v306
  %v309 = vunpack.c.l.s4 1966171168
  %v310 = vunpack.c.0.s8 %v309
  %v311 = vlaneseq
  %v312 = vshrl.u32 %v311, 7
  %v313 = vsub.s32 %v310, %v312
  %v314 = vrot.slane %v298, %v313
  %v316 = vunpack.c.l.s4 1966171168
  %v317 = vunpack.c.0.s8 %v316
  %v318 = vlaneseq
  %v319 = vshrl.u32 %v318, 7
  %v320 = vsub.s32 %v317, %v319
  %v321 = vrot.slane %v299, %v320
  %v323 = vunpack.c.l.s4 1966171168
  %v324 = vunpack.c.0.s8 %v323
  %v325 = vlaneseq
  %v326 = vshrl.u32 %v325, 7
  %v327 = vsub.s32 %v324, %v326
  %v328 = vrot.slane %v300, %v327
  %v329 = vcombine.high %v307, %v307
  %v330 = vcombine.high %v314, %v314
  %v331 = vcombine.high %v321, %v321
  %v332 = vcombine.high %v328, %v328
  %v333 = vcombine.high %v25, %v25
  %v335 = vunpack.c.l.s4 1966171168
  %v336 = vunpack.c.0.s8 %v335
  %v337 = vlaneseq
  %v338 = vshrl.u32 %v337, 7
  %v339 = vsub.s32 %v336, %v338
  %v340 = vrot.slane %v25, %v339
  %v342 = vunpack.c.l.s4 1966171168
  %v343 = vunpack.c.0.s8 %v342
  %v344 = vlaneseq
  %v345 = vshrl.u32 %v344, 7
  %v346 = vsub.s32 %v343, %v345
  %v347 = vrot.slane %v333, %v346
  %v348 = vcombine.high %v340, %v340
  %v349 = vcombine.high %v347, %v347
  %v351 = vunpack.c.l.s4 1966171168
  %v352 = vunpack.c.0.s8 %v351
  %v353 = vlaneseq
  %v354 = vshrl.u32 %v353, 7
  %v355 = vsub.s32 %v352, %v354
  %v356 = vrot.slane %v340, %v355
  %v358 = vunpack.c.l.s4 1966171168
  %v359 = vunpack.c.0.s8 %v358
  %v360 = vlaneseq
  %v361 = vshrl.u32 %v360, 7
  %v362 = vsub.s32 %v359, %v361
  %v363 = vrot.slane %v347, %v362
  %v365 = vunpack.c.l.s4 1966171168
  %v366 = vunpack.c.0.s8 %v365
  %v367 = vlaneseq
  %v368 = vshrl.u32 %v367, 7
  %v369 = vsub.s32 %v366, %v368
  %v370 = vrot.slane %v348, %v369
  %v372 = vunpack.c.l.s4 1966171168
  %v373 = vunpack.c.0.s8 %v372
  %v374 = vlaneseq
  %v375 = vshrl.u32 %v374, 7
  %v376 = vsub.s32 %v373, %v375
  %v377 = vrot.slane %v349, %v376
  %v378 = vcombine.high %v356, %v356
  %v379 = vcombine.high %v363, %v363
  %v380 = vcombine.high %v370, %v370
  %v381 = vcombine.high %v377, %v377
  %v382 = vcombine.high %v26, %v26
  %v384 = vunpack.c.l.s4 1966171168
  %v385 = vunpack.c.0.s8 %v384
  %v386 = vlaneseq
  %v387 = vshrl.u32 %v386, 7
  %v388 = vsub.s32 %v385, %v387
  %v389 = vrot.slane %v26, %v388
  %v391 = vunpack.c.l.s4 1966171168
  %v392 = vunpack.c.0.s8 %v391
  %v393 = vlaneseq
  %v394 = vshrl.u32 %v393, 7
  %v395 = vsub.s32 %v392, %v394
  %v396 = vrot.slane %v382, %v395
  %v397 = vcombine.high %v389, %v389
  %v398 = vcombine.high %v396, %v396
  %v400 = vunpack.c.l.s4 1966171168
  %v401 = vunpack.c.0.s8 %v400
  %v402 = vlaneseq
  %v403 = vshrl.u32 %v402, 7
  %v404 = vsub.s32 %v401, %v403
  %v405 = vrot.slane %v389, %v404
  %v407 = vunpack.c.l.s4 1966171168
  %v408 = vunpack.c.0.s8 %v407
  %v409 = vlaneseq
  %v410 = vshrl.u32 %v409, 7
  %v411 = vsub.s32 %v408, %v410
  %v412 = vrot.slane %v396, %v411
  %v414 = vunpack.c.l.s4 1966171168
  %v415 = vunpack.c.0.s8 %v414
  %v416 = vlaneseq
  %v417 = vshrl.u32 %v416, 7
  %v418 = vsub.s32 %v415, %v417
  %v419 = vrot.slane %v397, %v418
  %v421 = vunpack.c.l.s4 1966171168
  %v422 = vunpack.c.0.s8 %v421
  %v423 = vlaneseq
  %v424 = vshrl.u32 %v423, 7
  %v425 = vsub.s32 %v422, %v424
  %v426 = vrot.slane %v398, %v425
  %v427 = vcombine.high %v405, %v405
  %v428 = vcombine.high %v412, %v412
  %v429 = vcombine.high %v419, %v419
  %v430 = vcombine.high %v426, %v426
  %v431 = vld [vmem:[#allocation2] sm:$0xff]
  %v432 = vld [vmem:[#allocation2 + $0x8] sm:$0xff]
  %v433 = vld [vmem:[#allocation2 + $0x10] sm:$0xff]
  %v434 = vld [vmem:[#allocation2 + $0x18] sm:$0xff]
  %v435 = vld [vmem:[%s0] sm:$0xf]
  %v436 = vld [vmem:[%s0 + $0x4] sm:$0xf]
  %v437 = vld [vmem:[%s0 + $0x8] sm:$0xf]
  %v438 = vld [vmem:[%s0 + $0xc] sm:$0xf]
  %v439 = vlaneseq
  %v440 = vshrl.u32 %v439, 7
  %v441 = vsub.s32 0, %v440
  %v442 = vrot.slane %v258, %v441
  %v443 = vlaneseq
  %v444 = vshrl.u32 %v443, 7
  %v445 = vsub.s32 0, %v444
  %v446 = vrot.slane %v272, %v445
  %v447 = vlaneseq
  %v448 = vshrl.u32 %v447, 7
  %v449 = vsub.s32 0, %v448
  %v450 = vrot.slane %v280, %v449
  %v451 = vlaneseq
  %v452 = vshrl.u32 %v451, 7
  %v453 = vsub.s32 0, %v452
  %v454 = vrot.slane %v282, %v453
  %v455 = vlaneseq
  %v456 = vshrl.u32 %v455, 7
  %v457 = vsub.s32 0, %v456
  %v458 = vrot.slane %v265, %v457
  %v459 = vlaneseq
  %v460 = vshrl.u32 %v459, 7
  %v461 = vsub.s32 0, %v460
  %v462 = vrot.slane %v279, %v461
  %v463 = vlaneseq
  %v464 = vshrl.u32 %v463, 7
  %v465 = vsub.s32 0, %v464
  %v466 = vrot.slane %v281, %v465
  %v467 = vlaneseq
  %v468 = vshrl.u32 %v467, 7
  %v469 = vsub.s32 0, %v468
  %v470 = vrot.slane %v283, %v469
  %v471 = vlaneseq
  %v472 = vshrl.u32 %v471, 7
  %v473 = vsub.s32 0, %v472
  %v474 = vrot.slane %v307, %v473
  %v475 = vlaneseq
  %v476 = vshrl.u32 %v475, 7
  %v477 = vsub.s32 0, %v476
  %v478 = vrot.slane %v321, %v477
  %v479 = vlaneseq
  %v480 = vshrl.u32 %v479, 7
  %v481 = vsub.s32 0, %v480
  %v482 = vrot.slane %v329, %v481
  %v483 = vlaneseq
  %v484 = vshrl.u32 %v483, 7
  %v485 = vsub.s32 0, %v484
  %v486 = vrot.slane %v331, %v485
  %v487 = vlaneseq
  %v488 = vshrl.u32 %v487, 7
  %v489 = vsub.s32 0, %v488
  %v490 = vrot.slane %v314, %v489
  %v491 = vlaneseq
  %v492 = vshrl.u32 %v491, 7
  %v493 = vsub.s32 0, %v492
  %v494 = vrot.slane %v328, %v493
  %v495 = vlaneseq
  %v496 = vshrl.u32 %v495, 7
  %v497 = vsub.s32 0, %v496
  %v498 = vrot.slane %v330, %v497
  %v499 = vlaneseq
  %v500 = vshrl.u32 %v499, 7
  %v501 = vsub.s32 0, %v500
  %v502 = vrot.slane %v332, %v501
  %v503 = vlaneseq
  %v504 = vshrl.u32 %v503, 7
  %v505 = vsub.s32 0, %v504
  %v506 = vrot.slane %v356, %v505
  %v507 = vlaneseq
  %v508 = vshrl.u32 %v507, 7
  %v509 = vsub.s32 0, %v508
  %v510 = vrot.slane %v370, %v509
  %v511 = vlaneseq
  %v512 = vshrl.u32 %v511, 7
  %v513 = vsub.s32 0, %v512
  %v514 = vrot.slane %v378, %v513
  %v515 = vlaneseq
  %v516 = vshrl.u32 %v515, 7
  %v517 = vsub.s32 0, %v516
  %v518 = vrot.slane %v380, %v517
  %v519 = vlaneseq
  %v520 = vshrl.u32 %v519, 7
  %v521 = vsub.s32 0, %v520
  %v522 = vrot.slane %v363, %v521
  %v523 = vlaneseq
  %v524 = vshrl.u32 %v523, 7
  %v525 = vsub.s32 0, %v524
  %v526 = vrot.slane %v377, %v525
  %v527 = vlaneseq
  %v528 = vshrl.u32 %v527, 7
  %v529 = vsub.s32 0, %v528
  %v530 = vrot.slane %v379, %v529
  %v531 = vlaneseq
  %v532 = vshrl.u32 %v531, 7
  %v533 = vsub.s32 0, %v532
  %v534 = vrot.slane %v381, %v533
  %v535 = vlaneseq
  %v536 = vshrl.u32 %v535, 7
  %v537 = vsub.s32 0, %v536
  %v538 = vrot.slane %v405, %v537
  %v539 = vlaneseq
  %v540 = vshrl.u32 %v539, 7
  %v541 = vsub.s32 0, %v540
  %v542 = vrot.slane %v419, %v541
  %v543 = vlaneseq
  %v544 = vshrl.u32 %v543, 7
  %v545 = vsub.s32 0, %v544
  %v546 = vrot.slane %v427, %v545
  %v547 = vlaneseq
  %v548 = vshrl.u32 %v547, 7
  %v549 = vsub.s32 0, %v548
  %v550 = vrot.slane %v429, %v549
  %v551 = vlaneseq
  %v552 = vshrl.u32 %v551, 7
  %v553 = vsub.s32 0, %v552
  %v554 = vrot.slane %v412, %v553
  %v555 = vlaneseq
  %v556 = vshrl.u32 %v555, 7
  %v557 = vsub.s32 0, %v556
  %v558 = vrot.slane %v426, %v557
  %v559 = vlaneseq
  %v560 = vshrl.u32 %v559, 7
  %v561 = vsub.s32 0, %v560
  %v562 = vrot.slane %v428, %v561
  %v563 = vlaneseq
  %v564 = vshrl.u32 %v563, 7
  %v565 = vsub.s32 0, %v564
  %v566 = vrot.slane %v430, %v565
  %567 = vset.pattern.permute.xlu0 0
  %568 = vperm.xlu0 %567, %v442
  %v569 = vpop.permute.xlu0 %568
  %571 = vset.pattern.permute.xlu0 0
  %572 = vperm.xlu0 %571, %v446
  %v573 = vpop.permute.xlu0 %572
  %575 = vset.pattern.permute.xlu0 0
  %576 = vperm.xlu0 %575, %v450
  %v577 = vpop.permute.xlu0 %576
  %579 = vset.pattern.permute.xlu0 0
  %580 = vperm.xlu0 %579, %v454
  %v581 = vpop.permute.xlu0 %580
  %583 = vset.pattern.permute.xlu0 0
  %584 = vperm.xlu0 %583, %v458
  %v585 = vpop.permute.xlu0 %584
  %587 = vset.pattern.permute.xlu0 0
  %588 = vperm.xlu0 %587, %v462
  %v589 = vpop.permute.xlu0 %588
  %591 = vset.pattern.permute.xlu0 0
  %592 = vperm.xlu0 %591, %v466
  %v593 = vpop.permute.xlu0 %592
  %595 = vset.pattern.permute.xlu0 0
  %596 = vperm.xlu0 %595, %v470
  %v597 = vpop.permute.xlu0 %596
  %599 = vset.pattern.permute.xlu0 0
  %600 = vperm.xlu0 %599, %v474
  %v601 = vpop.permute.xlu0 %600
  %603 = vset.pattern.permute.xlu0 0
  %604 = vperm.xlu0 %603, %v478
  %v605 = vpop.permute.xlu0 %604
  %607 = vset.pattern.permute.xlu0 0
  %608 = vperm.xlu0 %607, %v482
  %v609 = vpop.permute.xlu0 %608
  %611 = vset.pattern.permute.xlu0 0
  %612 = vperm.xlu0 %611, %v486
  %v613 = vpop.permute.xlu0 %612
  %615 = vset.pattern.permute.xlu0 0
  %616 = vperm.xlu0 %615, %v490
  %v617 = vpop.permute.xlu0 %616
  %619 = vset.pattern.permute.xlu0 0
  %620 = vperm.xlu0 %619, %v494
  %v621 = vpop.permute.xlu0 %620
  %623 = vset.pattern.permute.xlu0 0
  %624 = vperm.xlu0 %623, %v498
  %v625 = vpop.permute.xlu0 %624
  %627 = vset.pattern.permute.xlu0 0
  %628 = vperm.xlu0 %627, %v502
  %v629 = vpop.permute.xlu0 %628
  %631 = vset.pattern.permute.xlu0 0
  %632 = vperm.xlu0 %631, %v506
  %v633 = vpop.permute.xlu0 %632
  %635 = vset.pattern.permute.xlu0 0
  %636 = vperm.xlu0 %635, %v510
  %v637 = vpop.permute.xlu0 %636
  %639 = vset.pattern.permute.xlu0 0
  %640 = vperm.xlu0 %639, %v514
  %v641 = vpop.permute.xlu0 %640
  %643 = vset.pattern.permute.xlu0 0
  %644 = vperm.xlu0 %643, %v518
  %v645 = vpop.permute.xlu0 %644
  %647 = vset.pattern.permute.xlu0 0
  %648 = vperm.xlu0 %647, %v522
  %v649 = vpop.permute.xlu0 %648
  %651 = vset.pattern.permute.xlu0 0
  %652 = vperm.xlu0 %651, %v526
  %v653 = vpop.permute.xlu0 %652
  %655 = vset.pattern.permute.xlu0 0
  %656 = vperm.xlu0 %655, %v530
  %v657 = vpop.permute.xlu0 %656
  %659 = vset.pattern.permute.xlu0 0
  %660 = vperm.xlu0 %659, %v534
  %v661 = vpop.permute.xlu0 %660
  %663 = vset.pattern.permute.xlu0 0
  %664 = vperm.xlu0 %663, %v538
  %v665 = vpop.permute.xlu0 %664
  %667 = vset.pattern.permute.xlu0 0
  %668 = vperm.xlu0 %667, %v542
  %v669 = vpop.permute.xlu0 %668
  %671 = vset.pattern.permute.xlu0 0
  %672 = vperm.xlu0 %671, %v546
  %v673 = vpop.permute.xlu0 %672
  %675 = vset.pattern.permute.xlu0 0
  %676 = vperm.xlu0 %675, %v550
  %v677 = vpop.permute.xlu0 %676
  %679 = vset.pattern.permute.xlu0 0
  %680 = vperm.xlu0 %679, %v554
  %v681 = vpop.permute.xlu0 %680
  %683 = vset.pattern.permute.xlu0 0
  %684 = vperm.xlu0 %683, %v558
  %v685 = vpop.permute.xlu0 %684
  %687 = vset.pattern.permute.xlu0 0
  %688 = vperm.xlu0 %687, %v562
  %v689 = vpop.permute.xlu0 %688
  %691 = vset.pattern.permute.xlu0 0
  %692 = vperm.xlu0 %691, %v566
  %v693 = vpop.permute.xlu0 %692
  %v695 = vmul.f32 %v569, %v435
  %v696 = vmul.f32 %v573, %v435
  %v697 = vmul.f32 %v577, %v435
  %v698 = vmul.f32 %v581, %v435
  %v699 = vmul.f32 %v585, %v435
  %v700 = vmul.f32 %v589, %v435
  %v701 = vmul.f32 %v593, %v435
  %v702 = vmul.f32 %v597, %v435
  %v703 = vmul.f32 %v601, %v435
  %v704 = vmul.f32 %v605, %v435
  %v705 = vmul.f32 %v609, %v435
  %v706 = vmul.f32 %v613, %v435
  %v707 = vmul.f32 %v617, %v435
  %v708 = vmul.f32 %v621, %v435
  %v709 = vmul.f32 %v625, %v435
  %v710 = vmul.f32 %v629, %v435
  %v711 = vmul.f32 %v633, %v435
  %v712 = vmul.f32 %v637, %v435
  %v713 = vmul.f32 %v641, %v435
  %v714 = vmul.f32 %v645, %v435
  %v715 = vmul.f32 %v649, %v435
  %v716 = vmul.f32 %v653, %v435
  %v717 = vmul.f32 %v657, %v435
  %v718 = vmul.f32 %v661, %v435
  %v719 = vmul.f32 %v665, %v435
  %v720 = vmul.f32 %v669, %v435
  %v721 = vmul.f32 %v673, %v435
  %v722 = vmul.f32 %v677, %v435
  %v723 = vmul.f32 %v681, %v435
  %v724 = vmul.f32 %v685, %v435
  %v725 = vmul.f32 %v689, %v435
  %v726 = vmul.f32 %v693, %v435
  %727 = vset.pattern.permute.xlu0 1
  %728 = vperm.xlu0 %727, %v442
  %v729 = vpop.permute.xlu0 %728
  %731 = vset.pattern.permute.xlu0 1
  %732 = vperm.xlu0 %731, %v446
  %v733 = vpop.permute.xlu0 %732
  %735 = vset.pattern.permute.xlu0 1
  %736 = vperm.xlu0 %735, %v450
  %v737 = vpop.permute.xlu0 %736
  %739 = vset.pattern.permute.xlu0 1
  %740 = vperm.xlu0 %739, %v454
  %v741 = vpop.permute.xlu0 %740
  %743 = vset.pattern.permute.xlu0 1
  %744 = vperm.xlu0 %743, %v458
  %v745 = vpop.permute.xlu0 %744
  %747 = vset.pattern.permute.xlu0 1
  %748 = vperm.xlu0 %747, %v462
  %v749 = vpop.permute.xlu0 %748
  %751 = vset.pattern.permute.xlu0 1
  %752 = vperm.xlu0 %751, %v466
  %v753 = vpop.permute.xlu0 %752
  %755 = vset.pattern.permute.xlu0 1
  %756 = vperm.xlu0 %755, %v470
  %v757 = vpop.permute.xlu0 %756
  %759 = vset.pattern.permute.xlu0 1
  %760 = vperm.xlu0 %759, %v474
  %v761 = vpop.permute.xlu0 %760
  %763 = vset.pattern.permute.xlu0 1
  %764 = vperm.xlu0 %763, %v478
  %v765 = vpop.permute.xlu0 %764
  %767 = vset.pattern.permute.xlu0 1
  %768 = vperm.xlu0 %767, %v482
  %v769 = vpop.permute.xlu0 %768
  %771 = vset.pattern.permute.xlu0 1
  %772 = vperm.xlu0 %771, %v486
  %v773 = vpop.permute.xlu0 %772
  %775 = vset.pattern.permute.xlu0 1
  %776 = vperm.xlu0 %775, %v490
  %v777 = vpop.permute.xlu0 %776
  %779 = vset.pattern.permute.xlu0 1
  %780 = vperm.xlu0 %779, %v494
  %v781 = vpop.permute.xlu0 %780
  %783 = vset.pattern.permute.xlu0 1
  %784 = vperm.xlu0 %783, %v498
  %v785 = vpop.permute.xlu0 %784
  %787 = vset.pattern.permute.xlu0 1
  %788 = vperm.xlu0 %787, %v502
  %v789 = vpop.permute.xlu0 %788
  %791 = vset.pattern.permute.xlu0 1
  %792 = vperm.xlu0 %791, %v506
  %v793 = vpop.permute.xlu0 %792
  %795 = vset.pattern.permute.xlu0 1
  %796 = vperm.xlu0 %795, %v510
  %v797 = vpop.permute.xlu0 %796
  %799 = vset.pattern.permute.xlu0 1
  %800 = vperm.xlu0 %799, %v514
  %v801 = vpop.permute.xlu0 %800
  %803 = vset.pattern.permute.xlu0 1
  %804 = vperm.xlu0 %803, %v518
  %v805 = vpop.permute.xlu0 %804
  %807 = vset.pattern.permute.xlu0 1
  %808 = vperm.xlu0 %807, %v522
  %v809 = vpop.permute.xlu0 %808
  %811 = vset.pattern.permute.xlu0 1
  %812 = vperm.xlu0 %811, %v526
  %v813 = vpop.permute.xlu0 %812
  %815 = vset.pattern.permute.xlu0 1
  %816 = vperm.xlu0 %815, %v530
  %v817 = vpop.permute.xlu0 %816
  %819 = vset.pattern.permute.xlu0 1
  %820 = vperm.xlu0 %819, %v534
  %v821 = vpop.permute.xlu0 %820
  %823 = vset.pattern.permute.xlu0 1
  %824 = vperm.xlu0 %823, %v538
  %v825 = vpop.permute.xlu0 %824
  %827 = vset.pattern.permute.xlu0 1
  %828 = vperm.xlu0 %827, %v542
  %v829 = vpop.permute.xlu0 %828
  %831 = vset.pattern.permute.xlu0 1
  %832 = vperm.xlu0 %831, %v546
  %v833 = vpop.permute.xlu0 %832
  %835 = vset.pattern.permute.xlu0 1
  %836 = vperm.xlu0 %835, %v550
  %v837 = vpop.permute.xlu0 %836
  %839 = vset.pattern.permute.xlu0 1
  %840 = vperm.xlu0 %839, %v554
  %v841 = vpop.permute.xlu0 %840
  %843 = vset.pattern.permute.xlu0 1
  %844 = vperm.xlu0 %843, %v558
  %v845 = vpop.permute.xlu0 %844
  %847 = vset.pattern.permute.xlu0 1
  %848 = vperm.xlu0 %847, %v562
  %v849 = vpop.permute.xlu0 %848
  %851 = vset.pattern.permute.xlu0 1
  %852 = vperm.xlu0 %851, %v566
  %v853 = vpop.permute.xlu0 %852
  %v855 = vmul.f32 %v729, %v436
  %v856 = vmul.f32 %v733, %v436
  %v857 = vmul.f32 %v737, %v436
  %v858 = vmul.f32 %v741, %v436
  %v859 = vmul.f32 %v745, %v436
  %v860 = vmul.f32 %v749, %v436
  %v861 = vmul.f32 %v753, %v436
  %v862 = vmul.f32 %v757, %v436
  %v863 = vmul.f32 %v761, %v436
  %v864 = vmul.f32 %v765, %v436
  %v865 = vmul.f32 %v769, %v436
  %v866 = vmul.f32 %v773, %v436
  %v867 = vmul.f32 %v777, %v436
  %v868 = vmul.f32 %v781, %v436
  %v869 = vmul.f32 %v785, %v436
  %v870 = vmul.f32 %v789, %v436
  %v871 = vmul.f32 %v793, %v436
  %v872 = vmul.f32 %v797, %v436
  %v873 = vmul.f32 %v801, %v436
  %v874 = vmul.f32 %v805, %v436
  %v875 = vmul.f32 %v809, %v436
  %v876 = vmul.f32 %v813, %v436
  %v877 = vmul.f32 %v817, %v436
  %v878 = vmul.f32 %v821, %v436
  %v879 = vmul.f32 %v825, %v436
  %v880 = vmul.f32 %v829, %v436
  %v881 = vmul.f32 %v833, %v436
  %v882 = vmul.f32 %v837, %v436
  %v883 = vmul.f32 %v841, %v436
  %v884 = vmul.f32 %v845, %v436
  %v885 = vmul.f32 %v849, %v436
  %v886 = vmul.f32 %v853, %v436
  %v887 = vadd.f32 %v695, %v855
  %v888 = vadd.f32 %v696, %v856
  %v889 = vadd.f32 %v697, %v857
  %v890 = vadd.f32 %v698, %v858
  %v891 = vadd.f32 %v699, %v859
  %v892 = vadd.f32 %v700, %v860
  %v893 = vadd.f32 %v701, %v861
  %v894 = vadd.f32 %v702, %v862
  %v895 = vadd.f32 %v703, %v863
  %v896 = vadd.f32 %v704, %v864
  %v897 = vadd.f32 %v705, %v865
  %v898 = vadd.f32 %v706, %v866
  %v899 = vadd.f32 %v707, %v867
  %v900 = vadd.f32 %v708, %v868
  %v901 = vadd.f32 %v709, %v869
  %v902 = vadd.f32 %v710, %v870
  %v903 = vadd.f32 %v711, %v871
  %v904 = vadd.f32 %v712, %v872
  %v905 = vadd.f32 %v713, %v873
  %v906 = vadd.f32 %v714, %v874
  %v907 = vadd.f32 %v715, %v875
  %v908 = vadd.f32 %v716, %v876
  %v909 = vadd.f32 %v717, %v877
  %v910 = vadd.f32 %v718, %v878
  %v911 = vadd.f32 %v719, %v879
  %v912 = vadd.f32 %v720, %v880
  %v913 = vadd.f32 %v721, %v881
  %v914 = vadd.f32 %v722, %v882
  %v915 = vadd.f32 %v723, %v883
  %v916 = vadd.f32 %v724, %v884
  %v917 = vadd.f32 %v725, %v885
  %v918 = vadd.f32 %v726, %v886
  %919 = vset.pattern.permute.xlu0 2
  %920 = vperm.xlu0 %919, %v442
  %v921 = vpop.permute.xlu0 %920
  %923 = vset.pattern.permute.xlu0 2
  %924 = vperm.xlu0 %923, %v446
  %v925 = vpop.permute.xlu0 %924
  %927 = vset.pattern.permute.xlu0 2
  %928 = vperm.xlu0 %927, %v450
  %v929 = vpop.permute.xlu0 %928
  %931 = vset.pattern.permute.xlu0 2
  %932 = vperm.xlu0 %931, %v454
  %v933 = vpop.permute.xlu0 %932
  %935 = vset.pattern.permute.xlu0 2
  %936 = vperm.xlu0 %935, %v458
  %v937 = vpop.permute.xlu0 %936
  %939 = vset.pattern.permute.xlu0 2
  %940 = vperm.xlu0 %939, %v462
  %v941 = vpop.permute.xlu0 %940
  %943 = vset.pattern.permute.xlu0 2
  %944 = vperm.xlu0 %943, %v466
  %v945 = vpop.permute.xlu0 %944
  %947 = vset.pattern.permute.xlu0 2
  %948 = vperm.xlu0 %947, %v470
  %v949 = vpop.permute.xlu0 %948
  %951 = vset.pattern.permute.xlu0 2
  %952 = vperm.xlu0 %951, %v474
  %v953 = vpop.permute.xlu0 %952
  %955 = vset.pattern.permute.xlu0 2
  %956 = vperm.xlu0 %955, %v478
  %v957 = vpop.permute.xlu0 %956
  %959 = vset.pattern.permute.xlu0 2
  %960 = vperm.xlu0 %959, %v482
  %v961 = vpop.permute.xlu0 %960
  %963 = vset.pattern.permute.xlu0 2
  %964 = vperm.xlu0 %963, %v486
  %v965 = vpop.permute.xlu0 %964
  %967 = vset.pattern.permute.xlu0 2
  %968 = vperm.xlu0 %967, %v490
  %v969 = vpop.permute.xlu0 %968
  %971 = vset.pattern.permute.xlu0 2
  %972 = vperm.xlu0 %971, %v494
  %v973 = vpop.permute.xlu0 %972
  %975 = vset.pattern.permute.xlu0 2
  %976 = vperm.xlu0 %975, %v498
  %v977 = vpop.permute.xlu0 %976
  %979 = vset.pattern.permute.xlu0 2
  %980 = vperm.xlu0 %979, %v502
  %v981 = vpop.permute.xlu0 %980
  %983 = vset.pattern.permute.xlu0 2
  %984 = vperm.xlu0 %983, %v506
  %v985 = vpop.permute.xlu0 %984
  %987 = vset.pattern.permute.xlu0 2
  %988 = vperm.xlu0 %987, %v510
  %v989 = vpop.permute.xlu0 %988
  %991 = vset.pattern.permute.xlu0 2
  %992 = vperm.xlu0 %991, %v514
  %v993 = vpop.permute.xlu0 %992
  %995 = vset.pattern.permute.xlu0 2
  %996 = vperm.xlu0 %995, %v518
  %v997 = vpop.permute.xlu0 %996
  %999 = vset.pattern.permute.xlu0 2
  %1000 = vperm.xlu0 %999, %v522
  %v1001 = vpop.permute.xlu0 %1000
  %1003 = vset.pattern.permute.xlu0 2
  %1004 = vperm.xlu0 %1003, %v526
  %v1005 = vpop.permute.xlu0 %1004
  %1007 = vset.pattern.permute.xlu0 2
  %1008 = vperm.xlu0 %1007, %v530
  %v1009 = vpop.permute.xlu0 %1008
  %1011 = vset.pattern.permute.xlu0 2
  %1012 = vperm.xlu0 %1011, %v534
  %v1013 = vpop.permute.xlu0 %1012
  %1015 = vset.pattern.permute.xlu0 2
  %1016 = vperm.xlu0 %1015, %v538
  %v1017 = vpop.permute.xlu0 %1016
  %1019 = vset.pattern.permute.xlu0 2
  %1020 = vperm.xlu0 %1019, %v542
  %v1021 = vpop.permute.xlu0 %1020
  %1023 = vset.pattern.permute.xlu0 2
  %1024 = vperm.xlu0 %1023, %v546
  %v1025 = vpop.permute.xlu0 %1024
  %1027 = vset.pattern.permute.xlu0 2
  %1028 = vperm.xlu0 %1027, %v550
  %v1029 = vpop.permute.xlu0 %1028
  %1031 = vset.pattern.permute.xlu0 2
  %1032 = vperm.xlu0 %1031, %v554
  %v1033 = vpop.permute.xlu0 %1032
  %1035 = vset.pattern.permute.xlu0 2
  %1036 = vperm.xlu0 %1035, %v558
  %v1037 = vpop.permute.xlu0 %1036
  %1039 = vset.pattern.permute.xlu0 2
  %1040 = vperm.xlu0 %1039, %v562
  %v1041 = vpop.permute.xlu0 %1040
  %1043 = vset.pattern.permute.xlu0 2
  %1044 = vperm.xlu0 %1043, %v566
  %v1045 = vpop.permute.xlu0 %1044
  %v1047 = vmul.f32 %v921, %v437
  %v1048 = vmul.f32 %v925, %v437
  %v1049 = vmul.f32 %v929, %v437
  %v1050 = vmul.f32 %v933, %v437
  %v1051 = vmul.f32 %v937, %v437
  %v1052 = vmul.f32 %v941, %v437
  %v1053 = vmul.f32 %v945, %v437
  %v1054 = vmul.f32 %v949, %v437
  %v1055 = vmul.f32 %v953, %v437
  %v1056 = vmul.f32 %v957, %v437
  %v1057 = vmul.f32 %v961, %v437
  %v1058 = vmul.f32 %v965, %v437
  %v1059 = vmul.f32 %v969, %v437
  %v1060 = vmul.f32 %v973, %v437
  %v1061 = vmul.f32 %v977, %v437
  %v1062 = vmul.f32 %v981, %v437
  %v1063 = vmul.f32 %v985, %v437
  %v1064 = vmul.f32 %v989, %v437
  %v1065 = vmul.f32 %v993, %v437
  %v1066 = vmul.f32 %v997, %v437
  %v1067 = vmul.f32 %v1001, %v437
  %v1068 = vmul.f32 %v1005, %v437
  %v1069 = vmul.f32 %v1009, %v437
  %v1070 = vmul.f32 %v1013, %v437
  %v1071 = vmul.f32 %v1017, %v437
  %v1072 = vmul.f32 %v1021, %v437
  %v1073 = vmul.f32 %v1025, %v437
  %v1074 = vmul.f32 %v1029, %v437
  %v1075 = vmul.f32 %v1033, %v437
  %v1076 = vmul.f32 %v1037, %v437
  %v1077 = vmul.f32 %v1041, %v437
  %v1078 = vmul.f32 %v1045, %v437
  %v1079 = vadd.f32 %v887, %v1047
  %v1080 = vadd.f32 %v888, %v1048
  %v1081 = vadd.f32 %v889, %v1049
  %v1082 = vadd.f32 %v890, %v1050
  %v1083 = vadd.f32 %v891, %v1051
  %v1084 = vadd.f32 %v892, %v1052
  %v1085 = vadd.f32 %v893, %v1053
  %v1086 = vadd.f32 %v894, %v1054
  %v1087 = vadd.f32 %v895, %v1055
  %v1088 = vadd.f32 %v896, %v1056
  %v1089 = vadd.f32 %v897, %v1057
  %v1090 = vadd.f32 %v898, %v1058
  %v1091 = vadd.f32 %v899, %v1059
  %v1092 = vadd.f32 %v900, %v1060
  %v1093 = vadd.f32 %v901, %v1061
  %v1094 = vadd.f32 %v902, %v1062
  %v1095 = vadd.f32 %v903, %v1063
  %v1096 = vadd.f32 %v904, %v1064
  %v1097 = vadd.f32 %v905, %v1065
  %v1098 = vadd.f32 %v906, %v1066
  %v1099 = vadd.f32 %v907, %v1067
  %v1100 = vadd.f32 %v908, %v1068
  %v1101 = vadd.f32 %v909, %v1069
  %v1102 = vadd.f32 %v910, %v1070
  %v1103 = vadd.f32 %v911, %v1071
  %v1104 = vadd.f32 %v912, %v1072
  %v1105 = vadd.f32 %v913, %v1073
  %v1106 = vadd.f32 %v914, %v1074
  %v1107 = vadd.f32 %v915, %v1075
  %v1108 = vadd.f32 %v916, %v1076
  %v1109 = vadd.f32 %v917, %v1077
  %v1110 = vadd.f32 %v918, %v1078
  %1111 = vset.pattern.permute.xlu0 3
  %1112 = vperm.xlu0 %1111, %v442
  %v1113 = vpop.permute.xlu0 %1112
  %1115 = vset.pattern.permute.xlu0 3
  %1116 = vperm.xlu0 %1115, %v446
  %v1117 = vpop.permute.xlu0 %1116
  %1119 = vset.pattern.permute.xlu0 3
  %1120 = vperm.xlu0 %1119, %v450
  %v1121 = vpop.permute.xlu0 %1120
  %1123 = vset.pattern.permute.xlu0 3
  %1124 = vperm.xlu0 %1123, %v454
  %v1125 = vpop.permute.xlu0 %1124
  %1127 = vset.pattern.permute.xlu0 3
  %1128 = vperm.xlu0 %1127, %v458
  %v1129 = vpop.permute.xlu0 %1128
  %1131 = vset.pattern.permute.xlu0 3
  %1132 = vperm.xlu0 %1131, %v462
  %v1133 = vpop.permute.xlu0 %1132
  %1135 = vset.pattern.permute.xlu0 3
  %1136 = vperm.xlu0 %1135, %v466
  %v1137 = vpop.permute.xlu0 %1136
  %1139 = vset.pattern.permute.xlu0 3
  %1140 = vperm.xlu0 %1139, %v470
  %v1141 = vpop.permute.xlu0 %1140
  %1143 = vset.pattern.permute.xlu0 3
  %1144 = vperm.xlu0 %1143, %v474
  %v1145 = vpop.permute.xlu0 %1144
  %1147 = vset.pattern.permute.xlu0 3
  %1148 = vperm.xlu0 %1147, %v478
  %v1149 = vpop.permute.xlu0 %1148
  %1151 = vset.pattern.permute.xlu0 3
  %1152 = vperm.xlu0 %1151, %v482
  %v1153 = vpop.permute.xlu0 %1152
  %1155 = vset.pattern.permute.xlu0 3
  %1156 = vperm.xlu0 %1155, %v486
  %v1157 = vpop.permute.xlu0 %1156
  %1159 = vset.pattern.permute.xlu0 3
  %1160 = vperm.xlu0 %1159, %v490
  %v1161 = vpop.permute.xlu0 %1160
  %1163 = vset.pattern.permute.xlu0 3
  %1164 = vperm.xlu0 %1163, %v494
  %v1165 = vpop.permute.xlu0 %1164
  %1167 = vset.pattern.permute.xlu0 3
  %1168 = vperm.xlu0 %1167, %v498
  %v1169 = vpop.permute.xlu0 %1168
  %1171 = vset.pattern.permute.xlu0 3
  %1172 = vperm.xlu0 %1171, %v502
  %v1173 = vpop.permute.xlu0 %1172
  %1175 = vset.pattern.permute.xlu0 3
  %1176 = vperm.xlu0 %1175, %v506
  %v1177 = vpop.permute.xlu0 %1176
  %1179 = vset.pattern.permute.xlu0 3
  %1180 = vperm.xlu0 %1179, %v510
  %v1181 = vpop.permute.xlu0 %1180
  %1183 = vset.pattern.permute.xlu0 3
  %1184 = vperm.xlu0 %1183, %v514
  %v1185 = vpop.permute.xlu0 %1184
  %1187 = vset.pattern.permute.xlu0 3
  %1188 = vperm.xlu0 %1187, %v518
  %v1189 = vpop.permute.xlu0 %1188
  %1191 = vset.pattern.permute.xlu0 3
  %1192 = vperm.xlu0 %1191, %v522
  %v1193 = vpop.permute.xlu0 %1192
  %1195 = vset.pattern.permute.xlu0 3
  %1196 = vperm.xlu0 %1195, %v526
  %v1197 = vpop.permute.xlu0 %1196
  %1199 = vset.pattern.permute.xlu0 3
  %1200 = vperm.xlu0 %1199, %v530
  %v1201 = vpop.permute.xlu0 %1200
  %1203 = vset.pattern.permute.xlu0 3
  %1204 = vperm.xlu0 %1203, %v534
  %v1205 = vpop.permute.xlu0 %1204
  %1207 = vset.pattern.permute.xlu0 3
  %1208 = vperm.xlu0 %1207, %v538
  %v1209 = vpop.permute.xlu0 %1208
  %1211 = vset.pattern.permute.xlu0 3
  %1212 = vperm.xlu0 %1211, %v542
  %v1213 = vpop.permute.xlu0 %1212
  %1215 = vset.pattern.permute.xlu0 3
  %1216 = vperm.xlu0 %1215, %v546
  %v1217 = vpop.permute.xlu0 %1216
  %1219 = vset.pattern.permute.xlu0 3
  %1220 = vperm.xlu0 %1219, %v550
  %v1221 = vpop.permute.xlu0 %1220
  %1223 = vset.pattern.permute.xlu0 3
  %1224 = vperm.xlu0 %1223, %v554
  %v1225 = vpop.permute.xlu0 %1224
  %1227 = vset.pattern.permute.xlu0 3
  %1228 = vperm.xlu0 %1227, %v558
  %v1229 = vpop.permute.xlu0 %1228
  %1231 = vset.pattern.permute.xlu0 3
  %1232 = vperm.xlu0 %1231, %v562
  %v1233 = vpop.permute.xlu0 %1232
  %1235 = vset.pattern.permute.xlu0 3
  %1236 = vperm.xlu0 %1235, %v566
  %v1237 = vpop.permute.xlu0 %1236
  %v1239 = vmul.f32 %v1113, %v438
  %v1240 = vmul.f32 %v1117, %v438
  %v1241 = vmul.f32 %v1121, %v438
  %v1242 = vmul.f32 %v1125, %v438
  %v1243 = vmul.f32 %v1129, %v438
  %v1244 = vmul.f32 %v1133, %v438
  %v1245 = vmul.f32 %v1137, %v438
  %v1246 = vmul.f32 %v1141, %v438
  %v1247 = vmul.f32 %v1145, %v438
  %v1248 = vmul.f32 %v1149, %v438
  %v1249 = vmul.f32 %v1153, %v438
  %v1250 = vmul.f32 %v1157, %v438
  %v1251 = vmul.f32 %v1161, %v438
  %v1252 = vmul.f32 %v1165, %v438
  %v1253 = vmul.f32 %v1169, %v438
  %v1254 = vmul.f32 %v1173, %v438
  %v1255 = vmul.f32 %v1177, %v438
  %v1256 = vmul.f32 %v1181, %v438
  %v1257 = vmul.f32 %v1185, %v438
  %v1258 = vmul.f32 %v1189, %v438
  %v1259 = vmul.f32 %v1193, %v438
  %v1260 = vmul.f32 %v1197, %v438
  %v1261 = vmul.f32 %v1201, %v438
  %v1262 = vmul.f32 %v1205, %v438
  %v1263 = vmul.f32 %v1209, %v438
  %v1264 = vmul.f32 %v1213, %v438
  %v1265 = vmul.f32 %v1217, %v438
  %v1266 = vmul.f32 %v1221, %v438
  %v1267 = vmul.f32 %v1225, %v438
  %v1268 = vmul.f32 %v1229, %v438
  %v1269 = vmul.f32 %v1233, %v438
  %v1270 = vmul.f32 %v1237, %v438
  %v1271 = vadd.f32 %v1079, %v1239
  %v1272 = vadd.f32 %v1080, %v1240
  %v1273 = vadd.f32 %v1081, %v1241
  %v1274 = vadd.f32 %v1082, %v1242
  %v1275 = vadd.f32 %v1083, %v1243
  %v1276 = vadd.f32 %v1084, %v1244
  %v1277 = vadd.f32 %v1085, %v1245
  %v1278 = vadd.f32 %v1086, %v1246
  %v1279 = vadd.f32 %v1087, %v1247
  %v1280 = vadd.f32 %v1088, %v1248
  %v1281 = vadd.f32 %v1089, %v1249
  %v1282 = vadd.f32 %v1090, %v1250
  %v1283 = vadd.f32 %v1091, %v1251
  %v1284 = vadd.f32 %v1092, %v1252
  %v1285 = vadd.f32 %v1093, %v1253
  %v1286 = vadd.f32 %v1094, %v1254
  %v1287 = vadd.f32 %v1095, %v1255
  %v1288 = vadd.f32 %v1096, %v1256
  %v1289 = vadd.f32 %v1097, %v1257
  %v1290 = vadd.f32 %v1098, %v1258
  %v1291 = vadd.f32 %v1099, %v1259
  %v1292 = vadd.f32 %v1100, %v1260
  %v1293 = vadd.f32 %v1101, %v1261
  %v1294 = vadd.f32 %v1102, %v1262
  %v1295 = vadd.f32 %v1103, %v1263
  %v1296 = vadd.f32 %v1104, %v1264
  %v1297 = vadd.f32 %v1105, %v1265
  %v1298 = vadd.f32 %v1106, %v1266
  %v1299 = vadd.f32 %v1107, %v1267
  %v1300 = vadd.f32 %v1108, %v1268
  %v1301 = vadd.f32 %v1109, %v1269
  %v1302 = vadd.f32 %v1110, %v1270
  %v1303 = vlaneseq
  %v1304 = vshrl.u32 %v1303, 7
  %v1305 = vsub.s32 0, %v1304
  %v1306 = vrot.slane %v58, %v1305
  %v1307 = vlaneseq
  %v1308 = vshrl.u32 %v1307, 7
  %v1309 = vsub.s32 0, %v1308
  %v1310 = vrot.slane %v72, %v1309
  %v1311 = vlaneseq
  %v1312 = vshrl.u32 %v1311, 7
  %v1313 = vsub.s32 0, %v1312
  %v1314 = vrot.slane %v80, %v1313
  %v1315 = vlaneseq
  %v1316 = vshrl.u32 %v1315, 7
  %v1317 = vsub.s32 0, %v1316
  %v1318 = vrot.slane %v82, %v1317
  %v1319 = vlaneseq
  %v1320 = vshrl.u32 %v1319, 7
  %v1321 = vsub.s32 0, %v1320
  %v1322 = vrot.slane %v65, %v1321
  %v1323 = vlaneseq
  %v1324 = vshrl.u32 %v1323, 7
  %v1325 = vsub.s32 0, %v1324
  %v1326 = vrot.slane %v79, %v1325
  %v1327 = vlaneseq
  %v1328 = vshrl.u32 %v1327, 7
  %v1329 = vsub.s32 0, %v1328
  %v1330 = vrot.slane %v81, %v1329
  %v1331 = vlaneseq
  %v1332 = vshrl.u32 %v1331, 7
  %v1333 = vsub.s32 0, %v1332
  %v1334 = vrot.slane %v83, %v1333
  %v1335 = vlaneseq
  %v1336 = vshrl.u32 %v1335, 7
  %v1337 = vsub.s32 0, %v1336
  %v1338 = vrot.slane %v107, %v1337
  %v1339 = vlaneseq
  %v1340 = vshrl.u32 %v1339, 7
  %v1341 = vsub.s32 0, %v1340
  %v1342 = vrot.slane %v121, %v1341
  %v1343 = vlaneseq
  %v1344 = vshrl.u32 %v1343, 7
  %v1345 = vsub.s32 0, %v1344
  %v1346 = vrot.slane %v129, %v1345
  %v1347 = vlaneseq
  %v1348 = vshrl.u32 %v1347, 7
  %v1349 = vsub.s32 0, %v1348
  %v1350 = vrot.slane %v131, %v1349
  %v1351 = vlaneseq
  %v1352 = vshrl.u32 %v1351, 7
  %v1353 = vsub.s32 0, %v1352
  %v1354 = vrot.slane %v114, %v1353
  %v1355 = vlaneseq
  %v1356 = vshrl.u32 %v1355, 7
  %v1357 = vsub.s32 0, %v1356
  %v1358 = vrot.slane %v128, %v1357
  %v1359 = vlaneseq
  %v1360 = vshrl.u32 %v1359, 7
  %v1361 = vsub.s32 0, %v1360
  %v1362 = vrot.slane %v130, %v1361
  %v1363 = vlaneseq
  %v1364 = vshrl.u32 %v1363, 7
  %v1365 = vsub.s32 0, %v1364
  %v1366 = vrot.slane %v132, %v1365
  %v1367 = vlaneseq
  %v1368 = vshrl.u32 %v1367, 7
  %v1369 = vsub.s32 0, %v1368
  %v1370 = vrot.slane %v156, %v1369
  %v1371 = vlaneseq
  %v1372 = vshrl.u32 %v1371, 7
  %v1373 = vsub.s32 0, %v1372
  %v1374 = vrot.slane %v170, %v1373
  %v1375 = vlaneseq
  %v1376 = vshrl.u32 %v1375, 7
  %v1377 = vsub.s32 0, %v1376
  %v1378 = vrot.slane %v178, %v1377
  %v1379 = vlaneseq
  %v1380 = vshrl.u32 %v1379, 7
  %v1381 = vsub.s32 0, %v1380
  %v1382 = vrot.slane %v180, %v1381
  %v1383 = vlaneseq
  %v1384 = vshrl.u32 %v1383, 7
  %v1385 = vsub.s32 0, %v1384
  %v1386 = vrot.slane %v163, %v1385
  %v1387 = vlaneseq
  %v1388 = vshrl.u32 %v1387, 7
  %v1389 = vsub.s32 0, %v1388
  %v1390 = vrot.slane %v177, %v1389
  %v1391 = vlaneseq
  %v1392 = vshrl.u32 %v1391, 7
  %v1393 = vsub.s32 0, %v1392
  %v1394 = vrot.slane %v179, %v1393
  %v1395 = vlaneseq
  %v1396 = vshrl.u32 %v1395, 7
  %v1397 = vsub.s32 0, %v1396
  %v1398 = vrot.slane %v181, %v1397
  %v1399 = vlaneseq
  %v1400 = vshrl.u32 %v1399, 7
  %v1401 = vsub.s32 0, %v1400
  %v1402 = vrot.slane %v205, %v1401
  %v1403 = vlaneseq
  %v1404 = vshrl.u32 %v1403, 7
  %v1405 = vsub.s32 0, %v1404
  %v1406 = vrot.slane %v219, %v1405
  %v1407 = vlaneseq
  %v1408 = vshrl.u32 %v1407, 7
  %v1409 = vsub.s32 0, %v1408
  %v1410 = vrot.slane %v227, %v1409
  %v1411 = vlaneseq
  %v1412 = vshrl.u32 %v1411, 7
  %v1413 = vsub.s32 0, %v1412
  %v1414 = vrot.slane %v229, %v1413
  %v1415 = vlaneseq
  %v1416 = vshrl.u32 %v1415, 7
  %v1417 = vsub.s32 0, %v1416
  %v1418 = vrot.slane %v212, %v1417
  %v1419 = vlaneseq
  %v1420 = vshrl.u32 %v1419, 7
  %v1421 = vsub.s32 0, %v1420
  %v1422 = vrot.slane %v226, %v1421
  %v1423 = vlaneseq
  %v1424 = vshrl.u32 %v1423, 7
  %v1425 = vsub.s32 0, %v1424
  %v1426 = vrot.slane %v228, %v1425
  %v1427 = vlaneseq
  %v1428 = vshrl.u32 %v1427, 7
  %v1429 = vsub.s32 0, %v1428
  %v1430 = vrot.slane %v230, %v1429
  %1431 = vset.pattern.permute.xlu0 0
  %1432 = vperm.xlu0 %1431, %v1306
  %v1433 = vpop.permute.xlu0 %1432
  %1435 = vset.pattern.permute.xlu0 0
  %1436 = vperm.xlu0 %1435, %v1310
  %v1437 = vpop.permute.xlu0 %1436
  %1439 = vset.pattern.permute.xlu0 0
  %1440 = vperm.xlu0 %1439, %v1314
  %v1441 = vpop.permute.xlu0 %1440
  %1443 = vset.pattern.permute.xlu0 0
  %1444 = vperm.xlu0 %1443, %v1318
  %v1445 = vpop.permute.xlu0 %1444
  %1447 = vset.pattern.permute.xlu0 0
  %1448 = vperm.xlu0 %1447, %v1322
  %v1449 = vpop.permute.xlu0 %1448
  %1451 = vset.pattern.permute.xlu0 0
  %1452 = vperm.xlu0 %1451, %v1326
  %v1453 = vpop.permute.xlu0 %1452
  %1455 = vset.pattern.permute.xlu0 0
  %1456 = vperm.xlu0 %1455, %v1330
  %v1457 = vpop.permute.xlu0 %1456
  %1459 = vset.pattern.permute.xlu0 0
  %1460 = vperm.xlu0 %1459, %v1334
  %v1461 = vpop.permute.xlu0 %1460
  %1463 = vset.pattern.permute.xlu0 0
  %1464 = vperm.xlu0 %1463, %v1338
  %v1465 = vpop.permute.xlu0 %1464
  %1467 = vset.pattern.permute.xlu0 0
  %1468 = vperm.xlu0 %1467, %v1342
  %v1469 = vpop.permute.xlu0 %1468
  %1471 = vset.pattern.permute.xlu0 0
  %1472 = vperm.xlu0 %1471, %v1346
  %v1473 = vpop.permute.xlu0 %1472
  %1475 = vset.pattern.permute.xlu0 0
  %1476 = vperm.xlu0 %1475, %v1350
  %v1477 = vpop.permute.xlu0 %1476
  %1479 = vset.pattern.permute.xlu0 0
  %1480 = vperm.xlu0 %1479, %v1354
  %v1481 = vpop.permute.xlu0 %1480
  %1483 = vset.pattern.permute.xlu0 0
  %1484 = vperm.xlu0 %1483, %v1358
  %v1485 = vpop.permute.xlu0 %1484
  %1487 = vset.pattern.permute.xlu0 0
  %1488 = vperm.xlu0 %1487, %v1362
  %v1489 = vpop.permute.xlu0 %1488
  %1491 = vset.pattern.permute.xlu0 0
  %1492 = vperm.xlu0 %1491, %v1366
  %v1493 = vpop.permute.xlu0 %1492
  %1495 = vset.pattern.permute.xlu0 0
  %1496 = vperm.xlu0 %1495, %v1370
  %v1497 = vpop.permute.xlu0 %1496
  %1499 = vset.pattern.permute.xlu0 0
  %1500 = vperm.xlu0 %1499, %v1374
  %v1501 = vpop.permute.xlu0 %1500
  %1503 = vset.pattern.permute.xlu0 0
  %1504 = vperm.xlu0 %1503, %v1378
  %v1505 = vpop.permute.xlu0 %1504
  %1507 = vset.pattern.permute.xlu0 0
  %1508 = vperm.xlu0 %1507, %v1382
  %v1509 = vpop.permute.xlu0 %1508
  %1511 = vset.pattern.permute.xlu0 0
  %1512 = vperm.xlu0 %1511, %v1386
  %v1513 = vpop.permute.xlu0 %1512
  %1515 = vset.pattern.permute.xlu0 0
  %1516 = vperm.xlu0 %1515, %v1390
  %v1517 = vpop.permute.xlu0 %1516
  %1519 = vset.pattern.permute.xlu0 0
  %1520 = vperm.xlu0 %1519, %v1394
  %v1521 = vpop.permute.xlu0 %1520
  %1523 = vset.pattern.permute.xlu0 0
  %1524 = vperm.xlu0 %1523, %v1398
  %v1525 = vpop.permute.xlu0 %1524
  %1527 = vset.pattern.permute.xlu0 0
  %1528 = vperm.xlu0 %1527, %v1402
  %v1529 = vpop.permute.xlu0 %1528
  %1531 = vset.pattern.permute.xlu0 0
  %1532 = vperm.xlu0 %1531, %v1406
  %v1533 = vpop.permute.xlu0 %1532
  %1535 = vset.pattern.permute.xlu0 0
  %1536 = vperm.xlu0 %1535, %v1410
  %v1537 = vpop.permute.xlu0 %1536
  %1539 = vset.pattern.permute.xlu0 0
  %1540 = vperm.xlu0 %1539, %v1414
  %v1541 = vpop.permute.xlu0 %1540
  %1543 = vset.pattern.permute.xlu0 0
  %1544 = vperm.xlu0 %1543, %v1418
  %v1545 = vpop.permute.xlu0 %1544
  %1547 = vset.pattern.permute.xlu0 0
  %1548 = vperm.xlu0 %1547, %v1422
  %v1549 = vpop.permute.xlu0 %1548
  %1551 = vset.pattern.permute.xlu0 0
  %1552 = vperm.xlu0 %1551, %v1426
  %v1553 = vpop.permute.xlu0 %1552
  %1555 = vset.pattern.permute.xlu0 0
  %1556 = vperm.xlu0 %1555, %v1430
  %v1557 = vpop.permute.xlu0 %1556
  %v1559 = vadd.f32 %v1271, %v1433
  %v1560 = vadd.f32 %v1272, %v1437
  %v1561 = vadd.f32 %v1273, %v1441
  %v1562 = vadd.f32 %v1274, %v1445
  %v1563 = vadd.f32 %v1275, %v1449
  %v1564 = vadd.f32 %v1276, %v1453
  %v1565 = vadd.f32 %v1277, %v1457
  %v1566 = vadd.f32 %v1278, %v1461
  %v1567 = vadd.f32 %v1279, %v1465
  %v1568 = vadd.f32 %v1280, %v1469
  %v1569 = vadd.f32 %v1281, %v1473
  %v1570 = vadd.f32 %v1282, %v1477
  %v1571 = vadd.f32 %v1283, %v1481
  %v1572 = vadd.f32 %v1284, %v1485
  %v1573 = vadd.f32 %v1285, %v1489
  %v1574 = vadd.f32 %v1286, %v1493
  %v1575 = vadd.f32 %v1287, %v1497
  %v1576 = vadd.f32 %v1288, %v1501
  %v1577 = vadd.f32 %v1289, %v1505
  %v1578 = vadd.f32 %v1290, %v1509
  %v1579 = vadd.f32 %v1291, %v1513
  %v1580 = vadd.f32 %v1292, %v1517
  %v1581 = vadd.f32 %v1293, %v1521
  %v1582 = vadd.f32 %v1294, %v1525
  %v1583 = vadd.f32 %v1295, %v1529
  %v1584 = vadd.f32 %v1296, %v1533
  %v1585 = vadd.f32 %v1297, %v1537
  %v1586 = vadd.f32 %v1298, %v1541
  %v1587 = vadd.f32 %v1299, %v1545
  %v1588 = vadd.f32 %v1300, %v1549
  %v1589 = vadd.f32 %v1301, %v1553
  %v1590 = vadd.f32 %v1302, %v1557
  %v1591 = vsub.f32 0.0, %v1559
  %v1592 = vsub.f32 0.0, %v1560
  %v1593 = vsub.f32 0.0, %v1561
  %v1594 = vsub.f32 0.0, %v1562
  %v1595 = vsub.f32 0.0, %v1563
  %v1596 = vsub.f32 0.0, %v1564
  %v1597 = vsub.f32 0.0, %v1565
  %v1598 = vsub.f32 0.0, %v1566
  %v1599 = vsub.f32 0.0, %v1567
  %v1600 = vsub.f32 0.0, %v1568
  %v1601 = vsub.f32 0.0, %v1569
  %v1602 = vsub.f32 0.0, %v1570
  %v1603 = vsub.f32 0.0, %v1571
  %v1604 = vsub.f32 0.0, %v1572
  %v1605 = vsub.f32 0.0, %v1573
  %v1606 = vsub.f32 0.0, %v1574
  %v1607 = vsub.f32 0.0, %v1575
  %v1608 = vsub.f32 0.0, %v1576
  %v1609 = vsub.f32 0.0, %v1577
  %v1610 = vsub.f32 0.0, %v1578
  %v1611 = vsub.f32 0.0, %v1579
  %v1612 = vsub.f32 0.0, %v1580
  %v1613 = vsub.f32 0.0, %v1581
  %v1614 = vsub.f32 0.0, %v1582
  %v1615 = vsub.f32 0.0, %v1583
  %v1616 = vsub.f32 0.0, %v1584
  %v1617 = vsub.f32 0.0, %v1585
  %v1618 = vsub.f32 0.0, %v1586
  %v1619 = vsub.f32 0.0, %v1587
  %v1620 = vsub.f32 0.0, %v1588
  %v1621 = vsub.f32 0.0, %v1589
  %v1622 = vsub.f32 0.0, %v1590
  %v1623 = vmul.f32 %v1591, 1.442695
  %v1624 = vpow.pop %v1623
  %v1625 = vmul.f32 %v1592, 1.442695
  %v1626 = vpow.pop %v1625
  %v1627 = vmul.f32 %v1593, 1.442695
  %v1628 = vpow.pop %v1627
  %v1629 = vmul.f32 %v1594, 1.442695
  %v1630 = vpow.pop %v1629
  %v1631 = vmul.f32 %v1595, 1.442695
  %v1632 = vpow.pop %v1631
  %v1633 = vmul.f32 %v1596, 1.442695
  %v1634 = vpow.pop %v1633
  %v1635 = vmul.f32 %v1597, 1.442695
  %v1636 = vpow.pop %v1635
  %v1637 = vmul.f32 %v1598, 1.442695
  %v1638 = vpow.pop %v1637
  %v1639 = vmul.f32 %v1599, 1.442695
  %v1640 = vpow.pop %v1639
  %v1641 = vmul.f32 %v1600, 1.442695
  %v1642 = vpow.pop %v1641
  %v1643 = vmul.f32 %v1601, 1.442695
  %v1644 = vpow.pop %v1643
  %v1645 = vmul.f32 %v1602, 1.442695
  %v1646 = vpow.pop %v1645
  %v1647 = vmul.f32 %v1603, 1.442695
  %v1648 = vpow.pop %v1647
  %v1649 = vmul.f32 %v1604, 1.442695
  %v1650 = vpow.pop %v1649
  %v1651 = vmul.f32 %v1605, 1.442695
  %v1652 = vpow.pop %v1651
  %v1653 = vmul.f32 %v1606, 1.442695
  %v1654 = vpow.pop %v1653
  %v1655 = vmul.f32 %v1607, 1.442695
  %v1656 = vpow.pop %v1655
  %v1657 = vmul.f32 %v1608, 1.442695
  %v1658 = vpow.pop %v1657
  %v1659 = vmul.f32 %v1609, 1.442695
  %v1660 = vpow.pop %v1659
  %v1661 = vmul.f32 %v1610, 1.442695
  %v1662 = vpow.pop %v1661
  %v1663 = vmul.f32 %v1611, 1.442695
  %v1664 = vpow.pop %v1663
  %v1665 = vmul.f32 %v1612, 1.442695
  %v1666 = vpow.pop %v1665
  %v1667 = vmul.f32 %v1613, 1.442695
  %v1668 = vpow.pop %v1667
  %v1669 = vmul.f32 %v1614, 1.442695
  %v1670 = vpow.pop %v1669
  %v1671 = vmul.f32 %v1615, 1.442695
  %v1672 = vpow.pop %v1671
  %v1673 = vmul.f32 %v1616, 1.442695
  %v1674 = vpow.pop %v1673
  %v1675 = vmul.f32 %v1617, 1.442695
  %v1676 = vpow.pop %v1675
  %v1677 = vmul.f32 %v1618, 1.442695
  %v1678 = vpow.pop %v1677
  %v1679 = vmul.f32 %v1619, 1.442695
  %v1680 = vpow.pop %v1679
  %v1681 = vmul.f32 %v1620, 1.442695
  %v1682 = vpow.pop %v1681
  %v1683 = vmul.f32 %v1621, 1.442695
  %v1684 = vpow.pop %v1683
  %v1685 = vmul.f32 %v1622, 1.442695
  %v1686 = vpow.pop %v1685
  %v1687 = vadd.f32 %v1624, 1.0
  %v1688 = vadd.f32 %v1626, 1.0
  %v1689 = vadd.f32 %v1628, 1.0
  %v1690 = vadd.f32 %v1630, 1.0
  %v1691 = vadd.f32 %v1632, 1.0
  %v1692 = vadd.f32 %v1634, 1.0
  %v1693 = vadd.f32 %v1636, 1.0
  %v1694 = vadd.f32 %v1638, 1.0
  %v1695 = vadd.f32 %v1640, 1.0
  %v1696 = vadd.f32 %v1642, 1.0
  %v1697 = vadd.f32 %v1644, 1.0
  %v1698 = vadd.f32 %v1646, 1.0
  %v1699 = vadd.f32 %v1648, 1.0
  %v1700 = vadd.f32 %v1650, 1.0
  %v1701 = vadd.f32 %v1652, 1.0
  %v1702 = vadd.f32 %v1654, 1.0
  %v1703 = vadd.f32 %v1656, 1.0
  %v1704 = vadd.f32 %v1658, 1.0
  %v1705 = vadd.f32 %v1660, 1.0
  %v1706 = vadd.f32 %v1662, 1.0
  %v1707 = vadd.f32 %v1664, 1.0
  %v1708 = vadd.f32 %v1666, 1.0
  %v1709 = vadd.f32 %v1668, 1.0
  %v1710 = vadd.f32 %v1670, 1.0
  %v1711 = vadd.f32 %v1672, 1.0
  %v1712 = vadd.f32 %v1674, 1.0
  %v1713 = vadd.f32 %v1676, 1.0
  %v1714 = vadd.f32 %v1678, 1.0
  %v1715 = vadd.f32 %v1680, 1.0
  %v1716 = vadd.f32 %v1682, 1.0
  %v1717 = vadd.f32 %v1684, 1.0
  %v1718 = vadd.f32 %v1686, 1.0
  %v1719 = vrcp.pop %v1687
  %v1720 = vrcp.pop %v1688
  %v1721 = vrcp.pop %v1689
  %v1722 = vrcp.pop %v1690
  %v1723 = vrcp.pop %v1691
  %v1724 = vrcp.pop %v1692
  %v1725 = vrcp.pop %v1693
  %v1726 = vrcp.pop %v1694
  %v1727 = vrcp.pop %v1695
  %v1728 = vrcp.pop %v1696
  %v1729 = vrcp.pop %v1697
  %v1730 = vrcp.pop %v1698
  %v1731 = vrcp.pop %v1699
  %v1732 = vrcp.pop %v1700
  %v1733 = vrcp.pop %v1701
  %v1734 = vrcp.pop %v1702
  %v1735 = vrcp.pop %v1703
  %v1736 = vrcp.pop %v1704
  %v1737 = vrcp.pop %v1705
  %v1738 = vrcp.pop %v1706
  %v1739 = vrcp.pop %v1707
  %v1740 = vrcp.pop %v1708
  %v1741 = vrcp.pop %v1709
  %v1742 = vrcp.pop %v1710
  %v1743 = vrcp.pop %v1711
  %v1744 = vrcp.pop %v1712
  %v1745 = vrcp.pop %v1713
  %v1746 = vrcp.pop %v1714
  %v1747 = vrcp.pop %v1715
  %v1748 = vrcp.pop %v1716
  %v1749 = vrcp.pop %v1717
  %v1750 = vrcp.pop %v1718
  %v1751 = vmul.f32 %v1559, %v1719
  %v1752 = vmul.f32 %v1560, %v1720
  %v1753 = vmul.f32 %v1561, %v1721
  %v1754 = vmul.f32 %v1562, %v1722
  %v1755 = vmul.f32 %v1563, %v1723
  %v1756 = vmul.f32 %v1564, %v1724
  %v1757 = vmul.f32 %v1565, %v1725
  %v1758 = vmul.f32 %v1566, %v1726
  %v1759 = vmul.f32 %v1567, %v1727
  %v1760 = vmul.f32 %v1568, %v1728
  %v1761 = vmul.f32 %v1569, %v1729
  %v1762 = vmul.f32 %v1570, %v1730
  %v1763 = vmul.f32 %v1571, %v1731
  %v1764 = vmul.f32 %v1572, %v1732
  %v1765 = vmul.f32 %v1573, %v1733
  %v1766 = vmul.f32 %v1574, %v1734
  %v1767 = vmul.f32 %v1575, %v1735
  %v1768 = vmul.f32 %v1576, %v1736
  %v1769 = vmul.f32 %v1577, %v1737
  %v1770 = vmul.f32 %v1578, %v1738
  %v1771 = vmul.f32 %v1579, %v1739
  %v1772 = vmul.f32 %v1580, %v1740
  %v1773 = vmul.f32 %v1581, %v1741
  %v1774 = vmul.f32 %v1582, %v1742
  %v1775 = vmul.f32 %v1583, %v1743
  %v1776 = vmul.f32 %v1584, %v1744
  %v1777 = vmul.f32 %v1585, %v1745
  %v1778 = vmul.f32 %v1586, %v1746
  %v1779 = vmul.f32 %v1587, %v1747
  %v1780 = vmul.f32 %v1588, %v1748
  %v1781 = vmul.f32 %v1589, %v1749
  %v1782 = vmul.f32 %v1590, %v1750
  %v1816 = vunpack.c.l.s4 1983009808
  %v1817 = vunpack.c.0.s8 %v1816
  %v1818 = vlaneseq
  %v1819 = vshrl.u32 %v1818, 7
  %v1820 = vsub.s32 %v1817, %v1819
  %v1821 = vrot.slane %v1751, %v1820
  %v1822 = vcombine.high %v1821, %v1821
  %v1824 = vunpack.c.l.s4 1983009808
  %v1825 = vunpack.c.0.s8 %v1824
  %v1826 = vlaneseq
  %v1827 = vshrl.u32 %v1826, 7
  %v1828 = vsub.s32 %v1825, %v1827
  %v1829 = vrot.slane %v1752, %v1828
  %v1830 = vcombine.high %v1829, %v1829
  %v1832 = vunpack.c.l.s4 1983009808
  %v1833 = vunpack.c.0.s8 %v1832
  %v1834 = vlaneseq
  %v1835 = vshrl.u32 %v1834, 7
  %v1836 = vsub.s32 %v1833, %v1835
  %v1837 = vrot.slane %v1753, %v1836
  %v1838 = vcombine.high %v1837, %v1837
  %v1840 = vunpack.c.l.s4 1983009808
  %v1841 = vunpack.c.0.s8 %v1840
  %v1842 = vlaneseq
  %v1843 = vshrl.u32 %v1842, 7
  %v1844 = vsub.s32 %v1841, %v1843
  %v1845 = vrot.slane %v1754, %v1844
  %v1846 = vcombine.high %v1845, %v1845
  %v1848 = vunpack.c.l.s4 1983009808
  %v1849 = vunpack.c.0.s8 %v1848
  %v1850 = vlaneseq
  %v1851 = vshrl.u32 %v1850, 7
  %v1852 = vsub.s32 %v1849, %v1851
  %v1853 = vrot.slane %v1755, %v1852
  %v1854 = vcombine.high %v1853, %v1853
  %v1856 = vunpack.c.l.s4 1983009808
  %v1857 = vunpack.c.0.s8 %v1856
  %v1858 = vlaneseq
  %v1859 = vshrl.u32 %v1858, 7
  %v1860 = vsub.s32 %v1857, %v1859
  %v1861 = vrot.slane %v1756, %v1860
  %v1862 = vcombine.high %v1861, %v1861
  %v1864 = vunpack.c.l.s4 1983009808
  %v1865 = vunpack.c.0.s8 %v1864
  %v1866 = vlaneseq
  %v1867 = vshrl.u32 %v1866, 7
  %v1868 = vsub.s32 %v1865, %v1867
  %v1869 = vrot.slane %v1757, %v1868
  %v1870 = vcombine.high %v1869, %v1869
  %v1872 = vunpack.c.l.s4 1983009808
  %v1873 = vunpack.c.0.s8 %v1872
  %v1874 = vlaneseq
  %v1875 = vshrl.u32 %v1874, 7
  %v1876 = vsub.s32 %v1873, %v1875
  %v1877 = vrot.slane %v1758, %v1876
  %v1878 = vcombine.high %v1877, %v1877
  %v1880 = vunpack.c.l.s4 1983009808
  %v1881 = vunpack.c.0.s8 %v1880
  %v1882 = vlaneseq
  %v1883 = vshrl.u32 %v1882, 7
  %v1884 = vsub.s32 %v1881, %v1883
  %v1885 = vrot.slane %v1759, %v1884
  %v1886 = vcombine.high %v1885, %v1885
  %v1888 = vunpack.c.l.s4 1983009808
  %v1889 = vunpack.c.0.s8 %v1888
  %v1890 = vlaneseq
  %v1891 = vshrl.u32 %v1890, 7
  %v1892 = vsub.s32 %v1889, %v1891
  %v1893 = vrot.slane %v1760, %v1892
  %v1894 = vcombine.high %v1893, %v1893
  %v1896 = vunpack.c.l.s4 1983009808
  %v1897 = vunpack.c.0.s8 %v1896
  %v1898 = vlaneseq
  %v1899 = vshrl.u32 %v1898, 7
  %v1900 = vsub.s32 %v1897, %v1899
  %v1901 = vrot.slane %v1761, %v1900
  %v1902 = vcombine.high %v1901, %v1901
  %v1904 = vunpack.c.l.s4 1983009808
  %v1905 = vunpack.c.0.s8 %v1904
  %v1906 = vlaneseq
  %v1907 = vshrl.u32 %v1906, 7
  %v1908 = vsub.s32 %v1905, %v1907
  %v1909 = vrot.slane %v1762, %v1908
  %v1910 = vcombine.high %v1909, %v1909
  %v1912 = vunpack.c.l.s4 1983009808
  %v1913 = vunpack.c.0.s8 %v1912
  %v1914 = vlaneseq
  %v1915 = vshrl.u32 %v1914, 7
  %v1916 = vsub.s32 %v1913, %v1915
  %v1917 = vrot.slane %v1763, %v1916
  %v1918 = vcombine.high %v1917, %v1917
  %v1920 = vunpack.c.l.s4 1983009808
  %v1921 = vunpack.c.0.s8 %v1920
  %v1922 = vlaneseq
  %v1923 = vshrl.u32 %v1922, 7
  %v1924 = vsub.s32 %v1921, %v1923
  %v1925 = vrot.slane %v1764, %v1924
  %v1926 = vcombine.high %v1925, %v1925
  %v1928 = vunpack.c.l.s4 1983009808
  %v1929 = vunpack.c.0.s8 %v1928
  %v1930 = vlaneseq
  %v1931 = vshrl.u32 %v1930, 7
  %v1932 = vsub.s32 %v1929, %v1931
  %v1933 = vrot.slane %v1765, %v1932
  %v1934 = vcombine.high %v1933, %v1933
  %v1936 = vunpack.c.l.s4 1983009808
  %v1937 = vunpack.c.0.s8 %v1936
  %v1938 = vlaneseq
  %v1939 = vshrl.u32 %v1938, 7
  %v1940 = vsub.s32 %v1937, %v1939
  %v1941 = vrot.slane %v1766, %v1940
  %v1942 = vcombine.high %v1941, %v1941
  %v1944 = vunpack.c.l.s4 1983009808
  %v1945 = vunpack.c.0.s8 %v1944
  %v1946 = vlaneseq
  %v1947 = vshrl.u32 %v1946, 7
  %v1948 = vsub.s32 %v1945, %v1947
  %v1949 = vrot.slane %v1767, %v1948
  %v1950 = vcombine.high %v1949, %v1949
  %v1952 = vunpack.c.l.s4 1983009808
  %v1953 = vunpack.c.0.s8 %v1952
  %v1954 = vlaneseq
  %v1955 = vshrl.u32 %v1954, 7
  %v1956 = vsub.s32 %v1953, %v1955
  %v1957 = vrot.slane %v1768, %v1956
  %v1958 = vcombine.high %v1957, %v1957
  %v1960 = vunpack.c.l.s4 1983009808
  %v1961 = vunpack.c.0.s8 %v1960
  %v1962 = vlaneseq
  %v1963 = vshrl.u32 %v1962, 7
  %v1964 = vsub.s32 %v1961, %v1963
  %v1965 = vrot.slane %v1769, %v1964
  %v1966 = vcombine.high %v1965, %v1965
  %v1968 = vunpack.c.l.s4 1983009808
  %v1969 = vunpack.c.0.s8 %v1968
  %v1970 = vlaneseq
  %v1971 = vshrl.u32 %v1970, 7
  %v1972 = vsub.s32 %v1969, %v1971
  %v1973 = vrot.slane %v1770, %v1972
  %v1974 = vcombine.high %v1973, %v1973
  %v1976 = vunpack.c.l.s4 1983009808
  %v1977 = vunpack.c.0.s8 %v1976
  %v1978 = vlaneseq
  %v1979 = vshrl.u32 %v1978, 7
  %v1980 = vsub.s32 %v1977, %v1979
  %v1981 = vrot.slane %v1771, %v1980
  %v1982 = vcombine.high %v1981, %v1981
  %v1984 = vunpack.c.l.s4 1983009808
  %v1985 = vunpack.c.0.s8 %v1984
  %v1986 = vlaneseq
  %v1987 = vshrl.u32 %v1986, 7
  %v1988 = vsub.s32 %v1985, %v1987
  %v1989 = vrot.slane %v1772, %v1988
  %v1990 = vcombine.high %v1989, %v1989
  %v1992 = vunpack.c.l.s4 1983009808
  %v1993 = vunpack.c.0.s8 %v1992
  %v1994 = vlaneseq
  %v1995 = vshrl.u32 %v1994, 7
  %v1996 = vsub.s32 %v1993, %v1995
  %v1997 = vrot.slane %v1773, %v1996
  %v1998 = vcombine.high %v1997, %v1997
  %v2000 = vunpack.c.l.s4 1983009808
  %v2001 = vunpack.c.0.s8 %v2000
  %v2002 = vlaneseq
  %v2003 = vshrl.u32 %v2002, 7
  %v2004 = vsub.s32 %v2001, %v2003
  %v2005 = vrot.slane %v1774, %v2004
  %v2006 = vcombine.high %v2005, %v2005
  %v2008 = vunpack.c.l.s4 1983009808
  %v2009 = vunpack.c.0.s8 %v2008
  %v2010 = vlaneseq
  %v2011 = vshrl.u32 %v2010, 7
  %v2012 = vsub.s32 %v2009, %v2011
  %v2013 = vrot.slane %v1775, %v2012
  %v2014 = vcombine.high %v2013, %v2013
  %v2016 = vunpack.c.l.s4 1983009808
  %v2017 = vunpack.c.0.s8 %v2016
  %v2018 = vlaneseq
  %v2019 = vshrl.u32 %v2018, 7
  %v2020 = vsub.s32 %v2017, %v2019
  %v2021 = vrot.slane %v1776, %v2020
  %v2022 = vcombine.high %v2021, %v2021
  %v2024 = vunpack.c.l.s4 1983009808
  %v2025 = vunpack.c.0.s8 %v2024
  %v2026 = vlaneseq
  %v2027 = vshrl.u32 %v2026, 7
  %v2028 = vsub.s32 %v2025, %v2027
  %v2029 = vrot.slane %v1777, %v2028
  %v2030 = vcombine.high %v2029, %v2029
  %v2032 = vunpack.c.l.s4 1983009808
  %v2033 = vunpack.c.0.s8 %v2032
  %v2034 = vlaneseq
  %v2035 = vshrl.u32 %v2034, 7
  %v2036 = vsub.s32 %v2033, %v2035
  %v2037 = vrot.slane %v1778, %v2036
  %v2038 = vcombine.high %v2037, %v2037
  %v2040 = vunpack.c.l.s4 1983009808
  %v2041 = vunpack.c.0.s8 %v2040
  %v2042 = vlaneseq
  %v2043 = vshrl.u32 %v2042, 7
  %v2044 = vsub.s32 %v2041, %v2043
  %v2045 = vrot.slane %v1779, %v2044
  %v2046 = vcombine.high %v2045, %v2045
  %v2048 = vunpack.c.l.s4 1983009808
  %v2049 = vunpack.c.0.s8 %v2048
  %v2050 = vlaneseq
  %v2051 = vshrl.u32 %v2050, 7
  %v2052 = vsub.s32 %v2049, %v2051
  %v2053 = vrot.slane %v1780, %v2052
  %v2054 = vcombine.high %v2053, %v2053
  %v2056 = vunpack.c.l.s4 1983009808
  %v2057 = vunpack.c.0.s8 %v2056
  %v2058 = vlaneseq
  %v2059 = vshrl.u32 %v2058, 7
  %v2060 = vsub.s32 %v2057, %v2059
  %v2061 = vrot.slane %v1781, %v2060
  %v2062 = vcombine.high %v2061, %v2061
  %v2064 = vunpack.c.l.s4 1983009808
  %v2065 = vunpack.c.0.s8 %v2064
  %v2066 = vlaneseq
  %v2067 = vshrl.u32 %v2066, 7
  %v2068 = vsub.s32 %v2065, %v2067
  %v2069 = vrot.slane %v1782, %v2068
  %v2070 = vcombine.high %v2069, %v2069
  %vm2135 = vcmask 1041408
  %v2136 = vsel %vm2135, %v1821, 0.0
  %v2137 = vsel %vm2135, %v1822, 0.0
  %v2138 = vadd.f32 %v2136, %v2137
  %2139 = vadd.xlane.f32.xlu0 %v2138
  %v2140 = vpop.xlane.xlu0 %2139
  %v2141 = vsel %vm2135, %v1829, 0.0
  %v2142 = vsel %vm2135, %v1830, 0.0
  %v2143 = vadd.f32 %v2141, %v2142
  %2144 = vadd.xlane.f32.xlu0 %v2143
  %v2145 = vpop.xlane.xlu0 %2144
  %v2146 = vsel %vm2135, %v1837, 0.0
  %v2147 = vsel %vm2135, %v1838, 0.0
  %v2148 = vadd.f32 %v2146, %v2147
  %2149 = vadd.xlane.f32.xlu0 %v2148
  %v2150 = vpop.xlane.xlu0 %2149
  %v2151 = vsel %vm2135, %v1845, 0.0
  %v2152 = vsel %vm2135, %v1846, 0.0
  %v2153 = vadd.f32 %v2151, %v2152
  %2154 = vadd.xlane.f32.xlu0 %v2153
  %v2155 = vpop.xlane.xlu0 %2154
  %v2156 = vsel %vm2135, %v1853, 0.0
  %v2157 = vsel %vm2135, %v1854, 0.0
  %v2158 = vadd.f32 %v2156, %v2157
  %2159 = vadd.xlane.f32.xlu0 %v2158
  %v2160 = vpop.xlane.xlu0 %2159
  %v2161 = vsel %vm2135, %v1861, 0.0
  %v2162 = vsel %vm2135, %v1862, 0.0
  %v2163 = vadd.f32 %v2161, %v2162
  %2164 = vadd.xlane.f32.xlu0 %v2163
  %v2165 = vpop.xlane.xlu0 %2164
  %v2166 = vsel %vm2135, %v1869, 0.0
  %v2167 = vsel %vm2135, %v1870, 0.0
  %v2168 = vadd.f32 %v2166, %v2167
  %2169 = vadd.xlane.f32.xlu0 %v2168
  %v2170 = vpop.xlane.xlu0 %2169
  %v2171 = vsel %vm2135, %v1877, 0.0
  %v2172 = vsel %vm2135, %v1878, 0.0
  %v2173 = vadd.f32 %v2171, %v2172
  %2174 = vadd.xlane.f32.xlu0 %v2173
  %v2175 = vpop.xlane.xlu0 %2174
  %v2176 = vsel %vm2135, %v1885, 0.0
  %v2177 = vsel %vm2135, %v1886, 0.0
  %v2178 = vadd.f32 %v2176, %v2177
  %2179 = vadd.xlane.f32.xlu0 %v2178
  %v2180 = vpop.xlane.xlu0 %2179
  %v2181 = vsel %vm2135, %v1893, 0.0
  %v2182 = vsel %vm2135, %v1894, 0.0
  %v2183 = vadd.f32 %v2181, %v2182
  %2184 = vadd.xlane.f32.xlu0 %v2183
  %v2185 = vpop.xlane.xlu0 %2184
  %v2186 = vsel %vm2135, %v1901, 0.0
  %v2187 = vsel %vm2135, %v1902, 0.0
  %v2188 = vadd.f32 %v2186, %v2187
  %2189 = vadd.xlane.f32.xlu0 %v2188
  %v2190 = vpop.xlane.xlu0 %2189
  %v2191 = vsel %vm2135, %v1909, 0.0
  %v2192 = vsel %vm2135, %v1910, 0.0
  %v2193 = vadd.f32 %v2191, %v2192
  %2194 = vadd.xlane.f32.xlu0 %v2193
  %v2195 = vpop.xlane.xlu0 %2194
  %v2196 = vsel %vm2135, %v1917, 0.0
  %v2197 = vsel %vm2135, %v1918, 0.0
  %v2198 = vadd.f32 %v2196, %v2197
  %2199 = vadd.xlane.f32.xlu0 %v2198
  %v2200 = vpop.xlane.xlu0 %2199
  %v2201 = vsel %vm2135, %v1925, 0.0
  %v2202 = vsel %vm2135, %v1926, 0.0
  %v2203 = vadd.f32 %v2201, %v2202
  %2204 = vadd.xlane.f32.xlu0 %v2203
  %v2205 = vpop.xlane.xlu0 %2204
  %v2206 = vsel %vm2135, %v1933, 0.0
  %v2207 = vsel %vm2135, %v1934, 0.0
  %v2208 = vadd.f32 %v2206, %v2207
  %2209 = vadd.xlane.f32.xlu0 %v2208
  %v2210 = vpop.xlane.xlu0 %2209
  %v2211 = vsel %vm2135, %v1941, 0.0
  %v2212 = vsel %vm2135, %v1942, 0.0
  %v2213 = vadd.f32 %v2211, %v2212
  %2214 = vadd.xlane.f32.xlu0 %v2213
  %v2215 = vpop.xlane.xlu0 %2214
  %v2216 = vsel %vm2135, %v1949, 0.0
  %v2217 = vsel %vm2135, %v1950, 0.0
  %v2218 = vadd.f32 %v2216, %v2217
  %2219 = vadd.xlane.f32.xlu0 %v2218
  %v2220 = vpop.xlane.xlu0 %2219
  %v2221 = vsel %vm2135, %v1957, 0.0
  %v2222 = vsel %vm2135, %v1958, 0.0
  %v2223 = vadd.f32 %v2221, %v2222
  %2224 = vadd.xlane.f32.xlu0 %v2223
  %v2225 = vpop.xlane.xlu0 %2224
  %v2226 = vsel %vm2135, %v1965, 0.0
  %v2227 = vsel %vm2135, %v1966, 0.0
  %v2228 = vadd.f32 %v2226, %v2227
  %2229 = vadd.xlane.f32.xlu0 %v2228
  %v2230 = vpop.xlane.xlu0 %2229
  %v2231 = vsel %vm2135, %v1973, 0.0
  %v2232 = vsel %vm2135, %v1974, 0.0
  %v2233 = vadd.f32 %v2231, %v2232
  %2234 = vadd.xlane.f32.xlu0 %v2233
  %v2235 = vpop.xlane.xlu0 %2234
  %v2236 = vsel %vm2135, %v1981, 0.0
  %v2237 = vsel %vm2135, %v1982, 0.0
  %v2238 = vadd.f32 %v2236, %v2237
  %2239 = vadd.xlane.f32.xlu0 %v2238
  %v2240 = vpop.xlane.xlu0 %2239
  %v2241 = vsel %vm2135, %v1989, 0.0
  %v2242 = vsel %vm2135, %v1990, 0.0
  %v2243 = vadd.f32 %v2241, %v2242
  %2244 = vadd.xlane.f32.xlu0 %v2243
  %v2245 = vpop.xlane.xlu0 %2244
  %v2246 = vsel %vm2135, %v1997, 0.0
  %v2247 = vsel %vm2135, %v1998, 0.0
  %v2248 = vadd.f32 %v2246, %v2247
  %2249 = vadd.xlane.f32.xlu0 %v2248
  %v2250 = vpop.xlane.xlu0 %2249
  %v2251 = vsel %vm2135, %v2005, 0.0
  %v2252 = vsel %vm2135, %v2006, 0.0
  %v2253 = vadd.f32 %v2251, %v2252
  %2254 = vadd.xlane.f32.xlu0 %v2253
  %v2255 = vpop.xlane.xlu0 %2254
  %v2256 = vsel %vm2135, %v2013, 0.0
  %v2257 = vsel %vm2135, %v2014, 0.0
  %v2258 = vadd.f32 %v2256, %v2257
  %2259 = vadd.xlane.f32.xlu0 %v2258
  %v2260 = vpop.xlane.xlu0 %2259
  %v2261 = vsel %vm2135, %v2021, 0.0
  %v2262 = vsel %vm2135, %v2022, 0.0
  %v2263 = vadd.f32 %v2261, %v2262
  %2264 = vadd.xlane.f32.xlu0 %v2263
  %v2265 = vpop.xlane.xlu0 %2264
  %v2266 = vsel %vm2135, %v2029, 0.0
  %v2267 = vsel %vm2135, %v2030, 0.0
  %v2268 = vadd.f32 %v2266, %v2267
  %2269 = vadd.xlane.f32.xlu0 %v2268
  %v2270 = vpop.xlane.xlu0 %2269
  %v2271 = vsel %vm2135, %v2037, 0.0
  %v2272 = vsel %vm2135, %v2038, 0.0
  %v2273 = vadd.f32 %v2271, %v2272
  %2274 = vadd.xlane.f32.xlu0 %v2273
  %v2275 = vpop.xlane.xlu0 %2274
  %v2276 = vsel %vm2135, %v2045, 0.0
  %v2277 = vsel %vm2135, %v2046, 0.0
  %v2278 = vadd.f32 %v2276, %v2277
  %2279 = vadd.xlane.f32.xlu0 %v2278
  %v2280 = vpop.xlane.xlu0 %2279
  %v2281 = vsel %vm2135, %v2053, 0.0
  %v2282 = vsel %vm2135, %v2054, 0.0
  %v2283 = vadd.f32 %v2281, %v2282
  %2284 = vadd.xlane.f32.xlu0 %v2283
  %v2285 = vpop.xlane.xlu0 %2284
  %v2286 = vsel %vm2135, %v2061, 0.0
  %v2287 = vsel %vm2135, %v2062, 0.0
  %v2288 = vadd.f32 %v2286, %v2287
  %2289 = vadd.xlane.f32.xlu0 %v2288
  %v2290 = vpop.xlane.xlu0 %2289
  %v2291 = vsel %vm2135, %v2069, 0.0
  %v2292 = vsel %vm2135, %v2070, 0.0
  %v2293 = vadd.f32 %v2291, %v2292
  %2294 = vadd.xlane.f32.xlu0 %v2293
  %v2295 = vpop.xlane.xlu0 %2294
  %v2328 = vlaneseq
  %v2329 = vand.u32 %v2328, 127
  %v2330 = vlaneseq
  %v2331 = vshrl.u32 %v2330, 7
  %v2332 = vsub.s32 %v2329, %v2331
  %v2333 = vrot.slane %v2140, %v2332
  %v2334 = vlaneseq
  %v2335 = vshrl.u32 %v2334, 7
  %v2336 = vsub.s32 %v2329, %v2335
  %v2337 = vrot.slane %v2145, %v2336
  %v2338 = vlaneseq
  %v2339 = vshrl.u32 %v2338, 7
  %v2340 = vsub.s32 %v2329, %v2339
  %v2341 = vrot.slane %v2150, %v2340
  %v2342 = vlaneseq
  %v2343 = vshrl.u32 %v2342, 7
  %v2344 = vsub.s32 %v2329, %v2343
  %v2345 = vrot.slane %v2155, %v2344
  %v2346 = vlaneseq
  %v2347 = vshrl.u32 %v2346, 7
  %v2348 = vsub.s32 %v2329, %v2347
  %v2349 = vrot.slane %v2160, %v2348
  %v2350 = vlaneseq
  %v2351 = vshrl.u32 %v2350, 7
  %v2352 = vsub.s32 %v2329, %v2351
  %v2353 = vrot.slane %v2165, %v2352
  %v2354 = vlaneseq
  %v2355 = vshrl.u32 %v2354, 7
  %v2356 = vsub.s32 %v2329, %v2355
  %v2357 = vrot.slane %v2170, %v2356
  %v2358 = vlaneseq
  %v2359 = vshrl.u32 %v2358, 7
  %v2360 = vsub.s32 %v2329, %v2359
  %v2361 = vrot.slane %v2175, %v2360
  %v2362 = vlaneseq
  %v2363 = vshrl.u32 %v2362, 7
  %v2364 = vsub.s32 %v2329, %v2363
  %v2365 = vrot.slane %v2180, %v2364
  %v2366 = vlaneseq
  %v2367 = vshrl.u32 %v2366, 7
  %v2368 = vsub.s32 %v2329, %v2367
  %v2369 = vrot.slane %v2185, %v2368
  %v2370 = vlaneseq
  %v2371 = vshrl.u32 %v2370, 7
  %v2372 = vsub.s32 %v2329, %v2371
  %v2373 = vrot.slane %v2190, %v2372
  %v2374 = vlaneseq
  %v2375 = vshrl.u32 %v2374, 7
  %v2376 = vsub.s32 %v2329, %v2375
  %v2377 = vrot.slane %v2195, %v2376
  %v2378 = vlaneseq
  %v2379 = vshrl.u32 %v2378, 7
  %v2380 = vsub.s32 %v2329, %v2379
  %v2381 = vrot.slane %v2200, %v2380
  %v2382 = vlaneseq
  %v2383 = vshrl.u32 %v2382, 7
  %v2384 = vsub.s32 %v2329, %v2383
  %v2385 = vrot.slane %v2205, %v2384
  %v2386 = vlaneseq
  %v2387 = vshrl.u32 %v2386, 7
  %v2388 = vsub.s32 %v2329, %v2387
  %v2389 = vrot.slane %v2210, %v2388
  %v2390 = vlaneseq
  %v2391 = vshrl.u32 %v2390, 7
  %v2392 = vsub.s32 %v2329, %v2391
  %v2393 = vrot.slane %v2215, %v2392
  %v2394 = vlaneseq
  %v2395 = vshrl.u32 %v2394, 7
  %v2396 = vsub.s32 %v2329, %v2395
  %v2397 = vrot.slane %v2220, %v2396
  %v2398 = vlaneseq
  %v2399 = vshrl.u32 %v2398, 7
  %v2400 = vsub.s32 %v2329, %v2399
  %v2401 = vrot.slane %v2225, %v2400
  %v2402 = vlaneseq
  %v2403 = vshrl.u32 %v2402, 7
  %v2404 = vsub.s32 %v2329, %v2403
  %v2405 = vrot.slane %v2230, %v2404
  %v2406 = vlaneseq
  %v2407 = vshrl.u32 %v2406, 7
  %v2408 = vsub.s32 %v2329, %v2407
  %v2409 = vrot.slane %v2235, %v2408
  %v2410 = vlaneseq
  %v2411 = vshrl.u32 %v2410, 7
  %v2412 = vsub.s32 %v2329, %v2411
  %v2413 = vrot.slane %v2240, %v2412
  %v2414 = vlaneseq
  %v2415 = vshrl.u32 %v2414, 7
  %v2416 = vsub.s32 %v2329, %v2415
  %v2417 = vrot.slane %v2245, %v2416
  %v2418 = vlaneseq
  %v2419 = vshrl.u32 %v2418, 7
  %v2420 = vsub.s32 %v2329, %v2419
  %v2421 = vrot.slane %v2250, %v2420
  %v2422 = vlaneseq
  %v2423 = vshrl.u32 %v2422, 7
  %v2424 = vsub.s32 %v2329, %v2423
  %v2425 = vrot.slane %v2255, %v2424
  %v2426 = vlaneseq
  %v2427 = vshrl.u32 %v2426, 7
  %v2428 = vsub.s32 %v2329, %v2427
  %v2429 = vrot.slane %v2260, %v2428
  %v2430 = vlaneseq
  %v2431 = vshrl.u32 %v2430, 7
  %v2432 = vsub.s32 %v2329, %v2431
  %v2433 = vrot.slane %v2265, %v2432
  %v2434 = vlaneseq
  %v2435 = vshrl.u32 %v2434, 7
  %v2436 = vsub.s32 %v2329, %v2435
  %v2437 = vrot.slane %v2270, %v2436
  %v2438 = vlaneseq
  %v2439 = vshrl.u32 %v2438, 7
  %v2440 = vsub.s32 %v2329, %v2439
  %v2441 = vrot.slane %v2275, %v2440
  %v2442 = vlaneseq
  %v2443 = vshrl.u32 %v2442, 7
  %v2444 = vsub.s32 %v2329, %v2443
  %v2445 = vrot.slane %v2280, %v2444
  %v2446 = vlaneseq
  %v2447 = vshrl.u32 %v2446, 7
  %v2448 = vsub.s32 %v2329, %v2447
  %v2449 = vrot.slane %v2285, %v2448
  %v2450 = vlaneseq
  %v2451 = vshrl.u32 %v2450, 7
  %v2452 = vsub.s32 %v2329, %v2451
  %v2453 = vrot.slane %v2290, %v2452
  %v2454 = vlaneseq
  %v2455 = vshrl.u32 %v2454, 7
  %v2456 = vsub.s32 %v2329, %v2455
  %v2457 = vrot.slane %v2295, %v2456
  %vm2458 = vcmask 1041409
  %v2459 = vsel %vm2458, %v2337, %v2333
  %vm2460 = vcmask 1042434
  %v2461 = vsel %vm2460, %v2341, %v2459
  %vm2462 = vcmask 1043459
  %v2463 = vsel %vm2462, %v2345, %v2461
  %vm2464 = vcmask 1044484
  %v2465 = vsel %vm2464, %v2349, %v2463
  %vm2466 = vcmask 1045509
  %v2467 = vsel %vm2466, %v2353, %v2465
  %vm2468 = vcmask 1046534
  %v2469 = vsel %vm2468, %v2357, %v2467
  %vm2470 = vcmask 1047559
  %v2471 = vsel %vm2470, %v2361, %v2469
  %v2472 = vsel %vm2458, %v2369, %v2365
  %v2473 = vsel %vm2460, %v2373, %v2472
  %v2474 = vsel %vm2462, %v2377, %v2473
  %v2475 = vsel %vm2464, %v2381, %v2474
  %v2476 = vsel %vm2466, %v2385, %v2475
  %v2477 = vsel %vm2468, %v2389, %v2476
  %v2478 = vsel %vm2470, %v2393, %v2477
  %v2479 = vsel %vm2458, %v2401, %v2397
  %v2480 = vsel %vm2460, %v2405, %v2479
  %v2481 = vsel %vm2462, %v2409, %v2480
  %v2482 = vsel %vm2464, %v2413, %v2481
  %v2483 = vsel %vm2466, %v2417, %v2482
  %v2484 = vsel %vm2468, %v2421, %v2483
  %v2485 = vsel %vm2470, %v2425, %v2484
  %v2486 = vsel %vm2458, %v2433, %v2429
  %v2487 = vsel %vm2460, %v2437, %v2486
  %v2488 = vsel %vm2462, %v2441, %v2487
  %v2489 = vsel %vm2464, %v2445, %v2488
  %v2490 = vsel %vm2466, %v2449, %v2489
  %v2491 = vsel %vm2468, %v2453, %v2490
  %v2492 = vsel %vm2470, %v2457, %v2491
  %v2497 = vadd.f32 %v431, %v2471
  %v2498 = vadd.f32 %v432, %v2478
  %v2499 = vadd.f32 %v433, %v2485
  %v2500 = vadd.f32 %v434, %v2492
  %vm2501 = vcmask 15360
  %2502 = vst.msk [vmem:[#allocation2] sm:$0xff] %vm2501, %v2497
  %2503 = vst.msk [vmem:[#allocation2 + $0x8] sm:$0xff] %vm2501, %v2498
  %2504 = vst.msk [vmem:[#allocation2 + $0x10] sm:$0xff] %vm2501, %v2499
  %2505 = vst.msk [vmem:[#allocation2 + $0x18] sm:$0xff] %vm2501, %v2500
  // Predicated region
  $region18: #{tpu_custom_call.1} parent=0 // pred_check
    %p2506 = pneg %p14
  $region19: #{tpu_custom_call.1} parent=0 // pred_check_branch
    %2508 = sbr.rel (%p2506) target = $region21
  $region20: #{tpu_custom_call.1} parent=0 // pred_region
    %v2509 = vld [vmem:[#allocation2] sm:$0xff]
    %v2510 = vld [vmem:[#allocation2 + $0x8] sm:$0xff]
    %v2511 = vld [vmem:[#allocation2 + $0x10] sm:$0xff]
    %v2512 = vld [vmem:[#allocation2 + $0x18] sm:$0xff]
    %v2513 = vmul.f32 %v2509, 0.00390625
    %v2514 = vmul.f32 %v2510, 0.00390625
    %v2515 = vmul.f32 %v2511, 0.00390625
    %v2516 = vmul.f32 %v2512, 0.00390625
    %2517 = vst.msk [vmem:[%s3] sm:$0xff] %vm2501, %v2513
    %2518 = vst.msk [vmem:[%s3 + $0x8] sm:$0xff] %vm2501, %v2514
    %2519 = vst.msk [vmem:[%s3 + $0x10] sm:$0xff] %vm2501, %v2515
    %2520 = vst.msk [vmem:[%s3 + $0x18] sm:$0xff] %vm2501, %v2516
  $region21: #{tpu_custom_call.1} parent=0 // pred_fallthru
    _
  // Predicated region
  $region22: #{tpu_custom_call.1} parent=0 // pred_check
    _
  $region23: #{tpu_custom_call.1} parent=0 // pred_check_branch
    %2522 = sbr.rel (0) target = $region25
  $region24: #{tpu_custom_call.1} parent=0 // pred_region
    _
  $region25: #{tpu_custom_call.1} parent=0 // pred_fallthru
    _
  // Predicated region
  $region26: #{tpu_custom_call.1} parent=0 // pred_check
    _
  $region27: #{tpu_custom_call.1} parent=0 // pred_check_branch
    %2524 = sbr.rel (0) target = $region29
  $region28: #{tpu_custom_call.1} parent=0 // pred_region
    _
  $region29: #{tpu_custom_call.1} parent=0 // pred_fallthru
    _

</llo_original>
